<compile_context>
chip_gen: v6e
topology: v6e:2x2x1
jax: 0.10.0
libtpu: 0.0.40
codegen_flags: <defaults>
</compile_context>

<pallas_src>
import functools

import jax
import jax.numpy as jnp
import numpy as np
from jax.experimental import pallas as pl
from jax.experimental.pallas import tpu as pltpu


# -----------------------------------------------------------------------------
# Pallas kernel: whole forward pass (fused bi-LSTM recurrence + fc1/tanh/fc3).
# Everything is tiny, so full-array VMEM BlockSpecs (no grid); the serial time
# recurrence runs as a fori_loop with (h, c_f, c_b) carries.
# -----------------------------------------------------------------------------
def _ner_bilstm_kernel(
    x_ref,      # (T*B, D)    time-major flattened input
    wih_ref,    # (D, 8H)     [fwd i,f,o,g | bwd i,f,o,g] input weights (pre-transposed)
    whh_ref,    # (2H, 8H)    block-diagonal recurrent weights (pre-transposed)
    b_ref,      # (1, 8H)     combined (b_ih + b_hh) for both directions
    w1_ref,     # (2H, 2H)    fc1 weight (pre-transposed)
    b1_ref,     # (1, 2H)     fc1 bias
    w3_ref,     # (2H, Cpad)  fc3 weight (pre-transposed, zero-padded to 128 lanes)
    b3_ref,     # (1, Cpad)   fc3 bias (zero-padded)
    out_ref,    # (T*B, Cpad) logits (lane-dense)
    proj_sc,    # scratch (T*B, 8H)  precomputed input projections
    hid_sc,     # scratch (T*B, 2H)  fc-ready LSTM hidden states [h_fwd | h_bwd]
    *,
    T,
    B,
    H,
):
    H2, H3, H4 = 2 * H, 3 * H, 4 * H

    # ---- 1. Hoisted input projection: one matmul for all time steps + both directions,
    #         bias added once (not per step).
    proj_sc[...] = (
        jnp.dot(x_ref[...], wih_ref[...], preferred_element_type=jnp.float32)
        + b_ref[...]
    )

    # Recurrent weights loaded once, outside the loop.
    whh = whh_ref[...]  # (2H, 8H)

    def gate_math(g, c):
        # g: (B, 4H) pre-activations in [i, f, o, g] order (torch [i,f,g,o] reordered).
        sg = jax.nn.sigmoid(g[:, :H3])      # one EUP dispatch for i, f, o
        gg = jnp.tanh(g[:, H3:H4])          # candidate gate
        c_new = sg[:, H:H2] * c + sg[:, :H] * gg
        h_new = sg[:, H2:H3] * jnp.tanh(c_new)
        return h_new, c_new

    def step(s, carry):
        h, c_f, c_b = carry                 # h: (B, 2H) = [h_fwd | h_bwd]
        # ---- 2. One block-diagonal matmul covers both directions' recurrent term.
        rec = jnp.dot(h, whh, preferred_element_type=jnp.float32)   # (B, 8H)

        fo = s * B                           # fwd processes time s
        bo = (T - 1 - s) * B                 # bwd processes time T-1-s

        g_f = rec[:, :H4] + proj_sc[pl.ds(fo, B), :H4]
        g_b = rec[:, H4:] + proj_sc[pl.ds(bo, B), H4:]

        h_f, c_f = gate_math(g_f, c_f)
        h_b, c_b = gate_math(g_b, c_b)

        # ---- 3. Write straight into the fc-ready (T*B, 2H) layout (no concat/reshape).
        hid_sc[pl.ds(fo, B), :H] = h_f
        hid_sc[pl.ds(bo, B), H:H2] = h_b

        h_next = jnp.concatenate([h_f, h_b], axis=-1)   # (B, 2H) carry for next matmul
        return h_next, c_f, c_b

    h0 = jnp.zeros((B, H2), jnp.float32)
    c0 = jnp.zeros((B, H), jnp.float32)
    jax.lax.fori_loop(0, T, step, (h0, c0, c0), unroll=True)

    # ---- 4. fc head on the flat slab; dropout is identity in eval mode.
    z = jnp.tanh(
        jnp.dot(hid_sc[...], w1_ref[...], preferred_element_type=jnp.float32)
        + b1_ref[...]
    )
    out_ref[...] = (
        jnp.dot(z, w3_ref[...], preferred_element_type=jnp.float32) + b3_ref[...]
    )


# -----------------------------------------------------------------------------
# Wrapper: weight re-layout (transpose, gate reorder, block-diagonal stacking,
# lane padding) happens here once; the kernel consumes MXU-ready operands.
# -----------------------------------------------------------------------------
def ner_lstm_forward(input_ids, params):
    """input_ids: (B, T, vec_dim) float32. Returns (logits, None) like the module."""
    B, T, D = input_ids.shape
    H = params["whh_f"].shape[1]
    C = params["w3"].shape[0]
    Cpad = ((C + 127) // 128) * 128

    def reorder(w):
        # torch gate order [i, f, g, o] (rows) -> kernel order [i, f, o, g]
        return jnp.concatenate(
            [w[0:H], w[H : 2 * H], w[3 * H : 4 * H], w[2 * H : 3 * H]], axis=0
        )

    # Input weights: (D, 8H) = [fwd i,f,o,g | bwd i,f,o,g]
    wih = jnp.concatenate(
        [reorder(params["wih_f"]).T, reorder(params["wih_b"]).T], axis=1
    )
    # Recurrent weights: block-diagonal (2H, 8H) so one matmul serves both directions.
    zeros_h4 = jnp.zeros((H, 4 * H), jnp.float32)
    whh = jnp.concatenate(
        [
            jnp.concatenate([reorder(params["whh_f"]).T, zeros_h4], axis=1),
            jnp.concatenate([zeros_h4, reorder(params["whh_b"]).T], axis=1),
        ],
        axis=0,
    )
    # Biases: (b_ih + b_hh) per direction, gate-reordered, combined.
    b = jnp.concatenate(
        [
            reorder(params["bih_f"] + params["bhh_f"]),
            reorder(params["bih_b"] + params["bhh_b"]),
        ]
    ).reshape(1, 8 * H)

    w1 = params["w1"].T                       # (2H, 2H)
    b1 = params["b1"].reshape(1, 2 * H)
    w3 = jnp.zeros((2 * H, Cpad), jnp.float32).at[:, :C].set(params["w3"].T)
    b3 = jnp.zeros((1, Cpad), jnp.float32).at[:, :C].set(params["b3"].reshape(1, C))

    # Time-major flatten: row index = t*B + b  (keeps all in-kernel indexing 2-D).
    x_tb = jnp.transpose(input_ids.astype(jnp.float32), (1, 0, 2)).reshape(T * B, D)

    kernel = functools.partial(_ner_bilstm_kernel, T=T, B=B, H=H)
    vmem = pl.BlockSpec(memory_space=pltpu.MemorySpace.VMEM)

    out = pl.pallas_call(
        kernel,
        out_shape=jax.ShapeDtypeStruct((T * B, Cpad), jnp.float32),
        in_specs=[vmem] * 8,
        out_specs=vmem,
        scratch_shapes=[
            pltpu.VMEM((T * B, 8 * H), jnp.float32),   # input projections
            pltpu.VMEM((T * B, 2 * H), jnp.float32),   # fc-ready LSTM hidden states
        ],
    )(x_tb, wih, whh, b, w1, b1, w3, b3)

    logits = jnp.transpose(out.reshape(T, B, Cpad), (1, 0, 2))[:, :, :C]  # (B, T, C)
    # x.squeeze(1): only squeezes if the seq dim is size 1 (matches torch semantics)
    if logits.shape[1] == 1:
        logits = jnp.squeeze(logits, axis=1)
    return logits, None


# -----------------------------------------------------------------------------
# Deterministic parameter init (shapes follow NERLSTM.__init__)
# -----------------------------------------------------------------------------
def init_params(key, vec_dim, num_classes, hidden_dim):
    H = hidden_dim
    keys = jax.random.split(key, 12)
    ku = 1.0 / np.sqrt(H)          # torch.nn.LSTM init bound
    kf = 1.0 / np.sqrt(2 * H)      # torch.nn.Linear init bound (fan_in = 2H)

    def u(k, shape, bound):
        return jax.random.uniform(k, shape, jnp.float32, -bound, bound)

    return {
        # forward direction LSTM
        "wih_f": u(keys[0], (4 * H, vec_dim), ku),
        "whh_f": u(keys[1], (4 * H, H), ku),
        "bih_f": u(keys[2], (4 * H,), ku),
        "bhh_f": u(keys[3], (4 * H,), ku),
        # backward direction LSTM
        "wih_b": u(keys[4], (4 * H, vec_dim), ku),
        "whh_b": u(keys[5], (4 * H, H), ku),
        "bih_b": u(keys[6], (4 * H,), ku),
        "bhh_b": u(keys[7], (4 * H,), ku),
        # fc1
        "w1": u(keys[8], (2 * H, 2 * H), kf),
        "b1": u(keys[9], (2 * H,), kf),
        # fc3
        "w3": u(keys[10], (num_classes, 2 * H), kf),
        "b3": u(keys[11], (num_classes,), kf),
        # NOTE: fc2 exists in __init__ but is never used in forward -> omitted.
    }


# -----------------------------------------------------------------------------
# Pure-JAX reference (same math, torch gate order) for a sanity check
# -----------------------------------------------------------------------------
def ref_forward(x, params):
    B, T, D = x.shape
    H = params["whh_f"].shape[1]

    def run_dir(wih, whh, b, reverse):
        h = jnp.zeros((B, H), jnp.float32)
        c = jnp.zeros((B, H), jnp.float32)
        outs = [None] * T
        order = range(T - 1, -1, -1) if reverse else range(T)
        for t in order:
            g = x[:, t, :] @ wih.T + h @ whh.T + b
            i = jax.nn.sigmoid(g[:, :H])
            f = jax.nn.sigmoid(g[:, H : 2 * H])
            gg = jnp.tanh(g[:, 2 * H : 3 * H])
            o = jax.nn.sigmoid(g[:, 3 * H :])
            c = f * c + i * gg
            h = o * jnp.tanh(c)
            outs[t] = h
        return jnp.stack(outs, axis=1)  # (B, T, H)

    bf = params["bih_f"] + params["bhh_f"]
    bb = params["bih_b"] + params["bhh_b"]
    out_f = run_dir(params["wih_f"], params["whh_f"], bf, reverse=False)
    out_b = run_dir(params["wih_b"], params["whh_b"], bb, reverse=True)
    lstm_out = jnp.concatenate([out_f, out_b], axis=-1)  # (B, T, 2H)
    z = jnp.tanh(lstm_out @ params["w1"].T + params["b1"])
    logits = z @ params["w3"].T + params["b3"]
    if logits.shape[1] == 1:
        logits = jnp.squeeze(logits, axis=1)
    return logits


if __name__ == "__main__":
    # small shapes consistent with the module's forward
    B, T = 2, 8
    VEC_DIM = 16       # LSTM input_size
    HIDDEN = 32        # hidden_dim
    NUM_CLASSES = 8

    key = jax.random.PRNGKey(0)
    k_x, k_p = jax.random.split(key)
    params = init_params(k_p, VEC_DIM, NUM_CLASSES, HIDDEN)
    input_ids = jax.random.normal(k_x, (B, T, VEC_DIM), dtype=jnp.float32)

    logits, loss = jax.jit(ner_lstm_forward)(input_ids, params)
    logits = jax.block_until_ready(logits)
    assert logits.shape == (B, T, NUM_CLASSES), logits.shape
    assert loss is None

    ref = jax.block_until_ready(ref_forward(input_ids, params))
    np.testing.assert_allclose(np.asarray(logits), np.asarray(ref), rtol=1e-2, atol=1e-2)

    print("KERNEL_OK")
</pallas_src>

<mosaic_0001>
module attributes {stable_mosaic.version = 11 : i64} {
  func.func @_ner_bilstm_kernel(%arg0: memref<16x16xf32, #tpu.memory_space<vmem>>, %arg1: memref<16x256xf32, #tpu.memory_space<vmem>>, %arg2: memref<64x256xf32, #tpu.memory_space<vmem>>, %arg3: memref<1x256xf32, #tpu.memory_space<vmem>>, %arg4: memref<64x64xf32, #tpu.memory_space<vmem>>, %arg5: memref<1x64xf32, #tpu.memory_space<vmem>>, %arg6: memref<64x128xf32, #tpu.memory_space<vmem>>, %arg7: memref<1x128xf32, #tpu.memory_space<vmem>>, %arg8: memref<16x128xf32, #tpu.memory_space<vmem>>, %arg9: memref<16x256xf32, #tpu.memory_space<vmem>>, %arg10: memref<16x64xf32, #tpu.memory_space<vmem>>) attributes {dimension_semantics = [], scalar_prefetch = 0 : i64, scratch_operands = 2 : i64, tpu.core_type = #tpu.core_type<tc>} {
    %c0 = arith.constant 0 : index
    %c0_0 = arith.constant 0 : index
    %0 = vector.load %arg0[%c0, %c0_0] : memref<16x16xf32, #tpu.memory_space<vmem>>, vector<16x16xf32>
    %c0_1 = arith.constant 0 : index
    %c0_2 = arith.constant 0 : index
    %1 = vector.load %arg1[%c0_1, %c0_2] : memref<16x256xf32, #tpu.memory_space<vmem>>, vector<16x256xf32>
    %cst = arith.constant dense<0.000000e+00> : vector<16x256xf32>
    %2 = tpu.matmul %0, %1, %cst {dimension_numbers = #tpu.dot_dimension_numbers<[1], [0], [0], [1], [0, 0, 1, 1], [], []>} : vector<16x16xf32>, vector<16x256xf32>, vector<16x256xf32> -> vector<16x256xf32>
    %c0_3 = arith.constant 0 : index
    %c0_4 = arith.constant 0 : index
    %3 = vector.load %arg3[%c0_3, %c0_4] : memref<1x256xf32, #tpu.memory_space<vmem>>, vector<1x256xf32>
    %4 = vector.broadcast %3 : vector<1x256xf32> to vector<16x256xf32>
    %5 = arith.addf %2, %4 : vector<16x256xf32>
    %c0_5 = arith.constant 0 : index
    %c0_6 = arith.constant 0 : index
    %6 = vector.load %arg9[%c0_5, %c0_6] : memref<16x256xf32, #tpu.memory_space<vmem>>, vector<16x256xf32>
    tpu.vector_store %arg9[%c0_5, %c0_6], %5 {strides = array<i32>} : memref<16x256xf32, #tpu.memory_space<vmem>>, vector<16x256xf32>,
    %c0_7 = arith.constant 0 : index
    %c0_8 = arith.constant 0 : index
    %7 = vector.load %arg2[%c0_7, %c0_8] : memref<64x256xf32, #tpu.memory_space<vmem>>, vector<64x256xf32>
    %cst_9 = arith.constant 0.000000e+00 : f32
    %8 = vector.broadcast %cst_9 : f32 to vector<2x64xf32>
    %cst_10 = arith.constant 0.000000e+00 : f32
    %9 = vector.broadcast %cst_10 : f32 to vector<2x32xf32>
    %c0_i32 = arith.constant 0 : i32
    %cst_11 = arith.constant dense<0.000000e+00> : vector<2x256xf32>
    %10 = tpu.matmul %8, %7, %cst_11 {dimension_numbers = #tpu.dot_dimension_numbers<[1], [0], [0], [1], [0, 0, 1, 1], [], []>} : vector<2x64xf32>, vector<64x256xf32>, vector<2x256xf32> -> vector<2x256xf32>
    %c2_i32 = arith.constant 2 : i32
    %11 = arith.muli %c0_i32, %c2_i32 : i32
    %c7_i32 = arith.constant 7 : i32
    %12 = arith.subi %c7_i32, %c0_i32 : i32
    %c2_i32_12 = arith.constant 2 : i32
    %13 = arith.muli %12, %c2_i32_12 : i32
    %14 = vector.extract_strided_slice %10 {offsets = [0, 0], sizes = [2, 128], strides = [1, 1]} : vector<2x256xf32> to vector<2x128xf32>
    %15 = arith.index_cast %11 : i32 to index
    %c0_13 = arith.constant 0 : index
    %16 = vector.load %arg9[%15, %c0_13] : memref<16x256xf32, #tpu.memory_space<vmem>>, vector<2x128xf32>
    %17 = arith.addf %14, %16 : vector<2x128xf32>
    %18 = vector.extract_strided_slice %10 {offsets = [0, 128], sizes = [2, 128], strides = [1, 1]} : vector<2x256xf32> to vector<2x128xf32>
    %19 = arith.index_cast %13 : i32 to index
    %c128 = arith.constant 128 : index
    %20 = vector.load %arg9[%19, %c128] : memref<16x256xf32, #tpu.memory_space<vmem>>, vector<2x128xf32>
    %21 = arith.addf %18, %20 : vector<2x128xf32>
    %22 = vector.extract_strided_slice %17 {offsets = [0, 0], sizes = [2, 96], strides = [1, 1]} : vector<2x128xf32> to vector<2x96xf32>
    %23 = arith.negf %22 : vector<2x96xf32>
    %24 = math.exp %23 : vector<2x96xf32>
    %cst_14 = arith.constant 1.000000e+00 : f32
    %25 = vector.broadcast %cst_14 : f32 to vector<2x96xf32>
    %26 = arith.addf %25, %24 : vector<2x96xf32>
    %27 = arith.divf %25, %26 : vector<2x96xf32>
    %28 = vector.extract_strided_slice %17 {offsets = [0, 96], sizes = [2, 32], strides = [1, 1]} : vector<2x128xf32> to vector<2x32xf32>
    %29 = math.tanh %28 : vector<2x32xf32>
    %30 = vector.extract_strided_slice %27 {offsets = [0, 32], sizes = [2, 32], strides = [1, 1]} : vector<2x96xf32> to vector<2x32xf32>
    %31 = arith.mulf %30, %9 : vector<2x32xf32>
    %32 = vector.extract_strided_slice %27 {offsets = [0, 0], sizes = [2, 32], strides = [1, 1]} : vector<2x96xf32> to vector<2x32xf32>
    %33 = arith.mulf %32, %29 : vector<2x32xf32>
    %34 = arith.addf %31, %33 : vector<2x32xf32>
    %35 = vector.extract_strided_slice %27 {offsets = [0, 64], sizes = [2, 32], strides = [1, 1]} : vector<2x96xf32> to vector<2x32xf32>
    %36 = math.tanh %34 : vector<2x32xf32>
    %37 = arith.mulf %35, %36 : vector<2x32xf32>
    %38 = vector.extract_strided_slice %21 {offsets = [0, 0], sizes = [2, 96], strides = [1, 1]} : vector<2x128xf32> to vector<2x96xf32>
    %39 = arith.negf %38 : vector<2x96xf32>
    %40 = math.exp %39 : vector<2x96xf32>
    %cst_15 = arith.constant 1.000000e+00 : f32
    %41 = vector.broadcast %cst_15 : f32 to vector<2x96xf32>
    %42 = arith.addf %41, %40 : vector<2x96xf32>
    %43 = arith.divf %41, %42 : vector<2x96xf32>
    %44 = vector.extract_strided_slice %21 {offsets = [0, 96], sizes = [2, 32], strides = [1, 1]} : vector<2x128xf32> to vector<2x32xf32>
    %45 = math.tanh %44 : vector<2x32xf32>
    %46 = vector.extract_strided_slice %43 {offsets = [0, 32], sizes = [2, 32], strides = [1, 1]} : vector<2x96xf32> to vector<2x32xf32>
    %47 = arith.mulf %46, %9 : vector<2x32xf32>
    %48 = vector.extract_strided_slice %43 {offsets = [0, 0], sizes = [2, 32], strides = [1, 1]} : vector<2x96xf32> to vector<2x32xf32>
    %49 = arith.mulf %48, %45 : vector<2x32xf32>
    %50 = arith.addf %47, %49 : vector<2x32xf32>
    %51 = vector.extract_strided_slice %43 {offsets = [0, 64], sizes = [2, 32], strides = [1, 1]} : vector<2x96xf32> to vector<2x32xf32>
    %52 = math.tanh %50 : vector<2x32xf32>
    %53 = arith.mulf %51, %52 : vector<2x32xf32>
    %54 = arith.index_cast %11 : i32 to index
    %c0_16 = arith.constant 0 : index
    %55 = vector.load %arg10[%54, %c0_16] : memref<16x64xf32, #tpu.memory_space<vmem>>, vector<2x32xf32>
    tpu.vector_store %arg10[%54, %c0_16], %37 {strides = array<i32>} : memref<16x64xf32, #tpu.memory_space<vmem>>, vector<2x32xf32>,
    %56 = arith.index_cast %13 : i32 to index
    %c32 = arith.constant 32 : index
    %57 = vector.load %arg10[%56, %c32] : memref<16x64xf32, #tpu.memory_space<vmem>>, vector<2x32xf32>
    tpu.vector_store %arg10[%56, %c32], %53 {strides = array<i32>} : memref<16x64xf32, #tpu.memory_space<vmem>>, vector<2x32xf32>,
    %58 = tpu.concatenate %37, %53 in 1 : vector<2x32xf32>, vector<2x32xf32> -> vector<2x64xf32>
    %c1_i32 = arith.constant 1 : i32
    %cst_17 = arith.constant dense<0.000000e+00> : vector<2x256xf32>
    %59 = tpu.matmul %58, %7, %cst_17 {dimension_numbers = #tpu.dot_dimension_numbers<[1], [0], [0], [1], [0, 0, 1, 1], [], []>} : vector<2x64xf32>, vector<64x256xf32>, vector<2x256xf32> -> vector<2x256xf32>
    %c2_i32_18 = arith.constant 2 : i32
    %60 = arith.muli %c1_i32, %c2_i32_18 : i32
    %c7_i32_19 = arith.constant 7 : i32
    %61 = arith.subi %c7_i32_19, %c1_i32 : i32
    %c2_i32_20 = arith.constant 2 : i32
    %62 = arith.muli %61, %c2_i32_20 : i32
    %63 = vector.extract_strided_slice %59 {offsets = [0, 0], sizes = [2, 128], strides = [1, 1]} : vector<2x256xf32> to vector<2x128xf32>
    %64 = arith.index_cast %60 : i32 to index
    %c0_21 = arith.constant 0 : index
    %65 = vector.load %arg9[%64, %c0_21] : memref<16x256xf32, #tpu.memory_space<vmem>>, vector<2x128xf32>
    %66 = arith.addf %63, %65 : vector<2x128xf32>
    %67 = vector.extract_strided_slice %59 {offsets = [0, 128], sizes = [2, 128], strides = [1, 1]} : vector<2x256xf32> to vector<2x128xf32>
    %68 = arith.index_cast %62 : i32 to index
    %c128_22 = arith.constant 128 : index
    %69 = vector.load %arg9[%68, %c128_22] : memref<16x256xf32, #tpu.memory_space<vmem>>, vector<2x128xf32>
    %70 = arith.addf %67, %69 : vector<2x128xf32>
    %71 = vector.extract_strided_slice %66 {offsets = [0, 0], sizes = [2, 96], strides = [1, 1]} : vector<2x128xf32> to vector<2x96xf32>
    %72 = arith.negf %71 : vector<2x96xf32>
    %73 = math.exp %72 : vector<2x96xf32>
    %cst_23 = arith.constant 1.000000e+00 : f32
    %74 = vector.broadcast %cst_23 : f32 to vector<2x96xf32>
    %75 = arith.addf %74, %73 : vector<2x96xf32>
    %76 = arith.divf %74, %75 : vector<2x96xf32>
    %77 = vector.extract_strided_slice %66 {offsets = [0, 96], sizes = [2, 32], strides = [1, 1]} : vector<2x128xf32> to vector<2x32xf32>
    %78 = math.tanh %77 : vector<2x32xf32>
    %79 = vector.extract_strided_slice %76 {offsets = [0, 32], sizes = [2, 32], strides = [1, 1]} : vector<2x96xf32> to vector<2x32xf32>
    %80 = arith.mulf %79, %34 : vector<2x32xf32>
    %81 = vector.extract_strided_slice %76 {offsets = [0, 0], sizes = [2, 32], strides = [1, 1]} : vector<2x96xf32> to vector<2x32xf32>
    %82 = arith.mulf %81, %78 : vector<2x32xf32>
    %83 = arith.addf %80, %82 : vector<2x32xf32>
    %84 = vector.extract_strided_slice %76 {offsets = [0, 64], sizes = [2, 32], strides = [1, 1]} : vector<2x96xf32> to vector<2x32xf32>
    %85 = math.tanh %83 : vector<2x32xf32>
    %86 = arith.mulf %84, %85 : vector<2x32xf32>
    %87 = vector.extract_strided_slice %70 {offsets = [0, 0], sizes = [2, 96], strides = [1, 1]} : vector<2x128xf32> to vector<2x96xf32>
    %88 = arith.negf %87 : vector<2x96xf32>
    %89 = math.exp %88 : vector<2x96xf32>
    %cst_24 = arith.constant 1.000000e+00 : f32
    %90 = vector.broadcast %cst_24 : f32 to vector<2x96xf32>
    %91 = arith.addf %90, %89 : vector<2x96xf32>
    %92 = arith.divf %90, %91 : vector<2x96xf32>
    %93 = vector.extract_strided_slice %70 {offsets = [0, 96], sizes = [2, 32], strides = [1, 1]} : vector<2x128xf32> to vector<2x32xf32>
    %94 = math.tanh %93 : vector<2x32xf32>
    %95 = vector.extract_strided_slice %92 {offsets = [0, 32], sizes = [2, 32], strides = [1, 1]} : vector<2x96xf32> to vector<2x32xf32>
    %96 = arith.mulf %95, %50 : vector<2x32xf32>
    %97 = vector.extract_strided_slice %92 {offsets = [0, 0], sizes = [2, 32], strides = [1, 1]} : vector<2x96xf32> to vector<2x32xf32>
    %98 = arith.mulf %97, %94 : vector<2x32xf32>
    %99 = arith.addf %96, %98 : vector<2x32xf32>
    %100 = vector.extract_strided_slice %92 {offsets = [0, 64], sizes = [2, 32], strides = [1, 1]} : vector<2x96xf32> to vector<2x32xf32>
    %101 = math.tanh %99 : vector<2x32xf32>
    %102 = arith.mulf %100, %101 : vector<2x32xf32>
    %103 = arith.index_cast %60 : i32 to index
    %c0_25 = arith.constant 0 : index
    %104 = vector.load %arg10[%103, %c0_25] : memref<16x64xf32, #tpu.memory_space<vmem>>, vector<2x32xf32>
    tpu.vector_store %arg10[%103, %c0_25], %86 {strides = array<i32>} : memref<16x64xf32, #tpu.memory_space<vmem>>, vector<2x32xf32>,
    %105 = arith.index_cast %62 : i32 to index
    %c32_26 = arith.constant 32 : index
    %106 = vector.load %arg10[%105, %c32_26] : memref<16x64xf32, #tpu.memory_space<vmem>>, vector<2x32xf32>
    tpu.vector_store %arg10[%105, %c32_26], %102 {strides = array<i32>} : memref<16x64xf32, #tpu.memory_space<vmem>>, vector<2x32xf32>,
    %107 = tpu.concatenate %86, %102 in 1 : vector<2x32xf32>, vector<2x32xf32> -> vector<2x64xf32>
    %c2_i32_27 = arith.constant 2 : i32
    %cst_28 = arith.constant dense<0.000000e+00> : vector<2x256xf32>
    %108 = tpu.matmul %107, %7, %cst_28 {dimension_numbers = #tpu.dot_dimension_numbers<[1], [0], [0], [1], [0, 0, 1, 1], [], []>} : vector<2x64xf32>, vector<64x256xf32>, vector<2x256xf32> -> vector<2x256xf32>
    %c2_i32_29 = arith.constant 2 : i32
    %109 = arith.muli %c2_i32_27, %c2_i32_29 : i32
    %c7_i32_30 = arith.constant 7 : i32
    %110 = arith.subi %c7_i32_30, %c2_i32_27 : i32
    %c2_i32_31 = arith.constant 2 : i32
    %111 = arith.muli %110, %c2_i32_31 : i32
    %112 = vector.extract_strided_slice %108 {offsets = [0, 0], sizes = [2, 128], strides = [1, 1]} : vector<2x256xf32> to vector<2x128xf32>
    %113 = arith.index_cast %109 : i32 to index
    %c0_32 = arith.constant 0 : index
    %114 = vector.load %arg9[%113, %c0_32] : memref<16x256xf32, #tpu.memory_space<vmem>>, vector<2x128xf32>
    %115 = arith.addf %112, %114 : vector<2x128xf32>
    %116 = vector.extract_strided_slice %108 {offsets = [0, 128], sizes = [2, 128], strides = [1, 1]} : vector<2x256xf32> to vector<2x128xf32>
    %117 = arith.index_cast %111 : i32 to index
    %c128_33 = arith.constant 128 : index
    %118 = vector.load %arg9[%117, %c128_33] : memref<16x256xf32, #tpu.memory_space<vmem>>, vector<2x128xf32>
    %119 = arith.addf %116, %118 : vector<2x128xf32>
    %120 = vector.extract_strided_slice %115 {offsets = [0, 0], sizes = [2, 96], strides = [1, 1]} : vector<2x128xf32> to vector<2x96xf32>
    %121 = arith.negf %120 : vector<2x96xf32>
    %122 = math.exp %121 : vector<2x96xf32>
    %cst_34 = arith.constant 1.000000e+00 : f32
    %123 = vector.broadcast %cst_34 : f32 to vector<2x96xf32>
    %124 = arith.addf %123, %122 : vector<2x96xf32>
    %125 = arith.divf %123, %124 : vector<2x96xf32>
    %126 = vector.extract_strided_slice %115 {offsets = [0, 96], sizes = [2, 32], strides = [1, 1]} : vector<2x128xf32> to vector<2x32xf32>
    %127 = math.tanh %126 : vector<2x32xf32>
    %128 = vector.extract_strided_slice %125 {offsets = [0, 32], sizes = [2, 32], strides = [1, 1]} : vector<2x96xf32> to vector<2x32xf32>
    %129 = arith.mulf %128, %83 : vector<2x32xf32>
    %130 = vector.extract_strided_slice %125 {offsets = [0, 0], sizes = [2, 32], strides = [1, 1]} : vector<2x96xf32> to vector<2x32xf32>
    %131 = arith.mulf %130, %127 : vector<2x32xf32>
    %132 = arith.addf %129, %131 : vector<2x32xf32>
    %133 = vector.extract_strided_slice %125 {offsets = [0, 64], sizes = [2, 32], strides = [1, 1]} : vector<2x96xf32> to vector<2x32xf32>
    %134 = math.tanh %132 : vector<2x32xf32>
    %135 = arith.mulf %133, %134 : vector<2x32xf32>
    %136 = vector.extract_strided_slice %119 {offsets = [0, 0], sizes = [2, 96], strides = [1, 1]} : vector<2x128xf32> to vector<2x96xf32>
    %137 = arith.negf %136 : vector<2x96xf32>
    %138 = math.exp %137 : vector<2x96xf32>
    %cst_35 = arith.constant 1.000000e+00 : f32
    %139 = vector.broadcast %cst_35 : f32 to vector<2x96xf32>
    %140 = arith.addf %139, %138 : vector<2x96xf32>
    %141 = arith.divf %139, %140 : vector<2x96xf32>
    %142 = vector.extract_strided_slice %119 {offsets = [0, 96], sizes = [2, 32], strides = [1, 1]} : vector<2x128xf32> to vector<2x32xf32>
    %143 = math.tanh %142 : vector<2x32xf32>
    %144 = vector.extract_strided_slice %141 {offsets = [0, 32], sizes = [2, 32], strides = [1, 1]} : vector<2x96xf32> to vector<2x32xf32>
    %145 = arith.mulf %144, %99 : vector<2x32xf32>
    %146 = vector.extract_strided_slice %141 {offsets = [0, 0], sizes = [2, 32], strides = [1, 1]} : vector<2x96xf32> to vector<2x32xf32>
    %147 = arith.mulf %146, %143 : vector<2x32xf32>
    %148 = arith.addf %145, %147 : vector<2x32xf32>
    %149 = vector.extract_strided_slice %141 {offsets = [0, 64], sizes = [2, 32], strides = [1, 1]} : vector<2x96xf32> to vector<2x32xf32>
    %150 = math.tanh %148 : vector<2x32xf32>
    %151 = arith.mulf %149, %150 : vector<2x32xf32>
    %152 = arith.index_cast %109 : i32 to index
    %c0_36 = arith.constant 0 : index
    %153 = vector.load %arg10[%152, %c0_36] : memref<16x64xf32, #tpu.memory_space<vmem>>, vector<2x32xf32>
    tpu.vector_store %arg10[%152, %c0_36], %135 {strides = array<i32>} : memref<16x64xf32, #tpu.memory_space<vmem>>, vector<2x32xf32>,
    %154 = arith.index_cast %111 : i32 to index
    %c32_37 = arith.constant 32 : index
    %155 = vector.load %arg10[%154, %c32_37] : memref<16x64xf32, #tpu.memory_space<vmem>>, vector<2x32xf32>
    tpu.vector_store %arg10[%154, %c32_37], %151 {strides = array<i32>} : memref<16x64xf32, #tpu.memory_space<vmem>>, vector<2x32xf32>,
    %156 = tpu.concatenate %135, %151 in 1 : vector<2x32xf32>, vector<2x32xf32> -> vector<2x64xf32>
    %c3_i32 = arith.constant 3 : i32
    %cst_38 = arith.constant dense<0.000000e+00> : vector<2x256xf32>
    %157 = tpu.matmul %156, %7, %cst_38 {dimension_numbers = #tpu.dot_dimension_numbers<[1], [0], [0], [1], [0, 0, 1, 1], [], []>} : vector<2x64xf32>, vector<64x256xf32>, vector<2x256xf32> -> vector<2x256xf32>
    %c2_i32_39 = arith.constant 2 : i32
    %158 = arith.muli %c3_i32, %c2_i32_39 : i32
    %c7_i32_40 = arith.constant 7 : i32
    %159 = arith.subi %c7_i32_40, %c3_i32 : i32
    %c2_i32_41 = arith.constant 2 : i32
    %160 = arith.muli %159, %c2_i32_41 : i32
    %161 = vector.extract_strided_slice %157 {offsets = [0, 0], sizes = [2, 128], strides = [1, 1]} : vector<2x256xf32> to vector<2x128xf32>
    %162 = arith.index_cast %158 : i32 to index
    %c0_42 = arith.constant 0 : index
    %163 = vector.load %arg9[%162, %c0_42] : memref<16x256xf32, #tpu.memory_space<vmem>>, vector<2x128xf32>
    %164 = arith.addf %161, %163 : vector<2x128xf32>
    %165 = vector.extract_strided_slice %157 {offsets = [0, 128], sizes = [2, 128], strides = [1, 1]} : vector<2x256xf32> to vector<2x128xf32>
    %166 = arith.index_cast %160 : i32 to index
    %c128_43 = arith.constant 128 : index
    %167 = vector.load %arg9[%166, %c128_43] : memref<16x256xf32, #tpu.memory_space<vmem>>, vector<2x128xf32>
    %168 = arith.addf %165, %167 : vector<2x128xf32>
    %169 = vector.extract_strided_slice %164 {offsets = [0, 0], sizes = [2, 96], strides = [1, 1]} : vector<2x128xf32> to vector<2x96xf32>
    %170 = arith.negf %169 : vector<2x96xf32>
    %171 = math.exp %170 : vector<2x96xf32>
    %cst_44 = arith.constant 1.000000e+00 : f32
    %172 = vector.broadcast %cst_44 : f32 to vector<2x96xf32>
    %173 = arith.addf %172, %171 : vector<2x96xf32>
    %174 = arith.divf %172, %173 : vector<2x96xf32>
    %175 = vector.extract_strided_slice %164 {offsets = [0, 96], sizes = [2, 32], strides = [1, 1]} : vector<2x128xf32> to vector<2x32xf32>
    %176 = math.tanh %175 : vector<2x32xf32>
    %177 = vector.extract_strided_slice %174 {offsets = [0, 32], sizes = [2, 32], strides = [1, 1]} : vector<2x96xf32> to vector<2x32xf32>
    %178 = arith.mulf %177, %132 : vector<2x32xf32>
    %179 = vector.extract_strided_slice %174 {offsets = [0, 0], sizes = [2, 32], strides = [1, 1]} : vector<2x96xf32> to vector<2x32xf32>
    %180 = arith.mulf %179, %176 : vector<2x32xf32>
    %181 = arith.addf %178, %180 : vector<2x32xf32>
    %182 = vector.extract_strided_slice %174 {offsets = [0, 64], sizes = [2, 32], strides = [1, 1]} : vector<2x96xf32> to vector<2x32xf32>
    %183 = math.tanh %181 : vector<2x32xf32>
    %184 = arith.mulf %182, %183 : vector<2x32xf32>
    %185 = vector.extract_strided_slice %168 {offsets = [0, 0], sizes = [2, 96], strides = [1, 1]} : vector<2x128xf32> to vector<2x96xf32>
    %186 = arith.negf %185 : vector<2x96xf32>
    %187 = math.exp %186 : vector<2x96xf32>
    %cst_45 = arith.constant 1.000000e+00 : f32
    %188 = vector.broadcast %cst_45 : f32 to vector<2x96xf32>
    %189 = arith.addf %188, %187 : vector<2x96xf32>
    %190 = arith.divf %188, %189 : vector<2x96xf32>
    %191 = vector.extract_strided_slice %168 {offsets = [0, 96], sizes = [2, 32], strides = [1, 1]} : vector<2x128xf32> to vector<2x32xf32>
    %192 = math.tanh %191 : vector<2x32xf32>
    %193 = vector.extract_strided_slice %190 {offsets = [0, 32], sizes = [2, 32], strides = [1, 1]} : vector<2x96xf32> to vector<2x32xf32>
    %194 = arith.mulf %193, %148 : vector<2x32xf32>
    %195 = vector.extract_strided_slice %190 {offsets = [0, 0], sizes = [2, 32], strides = [1, 1]} : vector<2x96xf32> to vector<2x32xf32>
    %196 = arith.mulf %195, %192 : vector<2x32xf32>
    %197 = arith.addf %194, %196 : vector<2x32xf32>
    %198 = vector.extract_strided_slice %190 {offsets = [0, 64], sizes = [2, 32], strides = [1, 1]} : vector<2x96xf32> to vector<2x32xf32>
    %199 = math.tanh %197 : vector<2x32xf32>
    %200 = arith.mulf %198, %199 : vector<2x32xf32>
    %201 = arith.index_cast %158 : i32 to index
    %c0_46 = arith.constant 0 : index
    %202 = vector.load %arg10[%201, %c0_46] : memref<16x64xf32, #tpu.memory_space<vmem>>, vector<2x32xf32>
    tpu.vector_store %arg10[%201, %c0_46], %184 {strides = array<i32>} : memref<16x64xf32, #tpu.memory_space<vmem>>, vector<2x32xf32>,
    %203 = arith.index_cast %160 : i32 to index
    %c32_47 = arith.constant 32 : index
    %204 = vector.load %arg10[%203, %c32_47] : memref<16x64xf32, #tpu.memory_space<vmem>>, vector<2x32xf32>
    tpu.vector_store %arg10[%203, %c32_47], %200 {strides = array<i32>} : memref<16x64xf32, #tpu.memory_space<vmem>>, vector<2x32xf32>,
    %205 = tpu.concatenate %184, %200 in 1 : vector<2x32xf32>, vector<2x32xf32> -> vector<2x64xf32>
    %c4_i32 = arith.constant 4 : i32
    %cst_48 = arith.constant dense<0.000000e+00> : vector<2x256xf32>
    %206 = tpu.matmul %205, %7, %cst_48 {dimension_numbers = #tpu.dot_dimension_numbers<[1], [0], [0], [1], [0, 0, 1, 1], [], []>} : vector<2x64xf32>, vector<64x256xf32>, vector<2x256xf32> -> vector<2x256xf32>
    %c2_i32_49 = arith.constant 2 : i32
    %207 = arith.muli %c4_i32, %c2_i32_49 : i32
    %c7_i32_50 = arith.constant 7 : i32
    %208 = arith.subi %c7_i32_50, %c4_i32 : i32
    %c2_i32_51 = arith.constant 2 : i32
    %209 = arith.muli %208, %c2_i32_51 : i32
    %210 = vector.extract_strided_slice %206 {offsets = [0, 0], sizes = [2, 128], strides = [1, 1]} : vector<2x256xf32> to vector<2x128xf32>
    %211 = arith.index_cast %207 : i32 to index
    %c0_52 = arith.constant 0 : index
    %212 = vector.load %arg9[%211, %c0_52] : memref<16x256xf32, #tpu.memory_space<vmem>>, vector<2x128xf32>
    %213 = arith.addf %210, %212 : vector<2x128xf32>
    %214 = vector.extract_strided_slice %206 {offsets = [0, 128], sizes = [2, 128], strides = [1, 1]} : vector<2x256xf32> to vector<2x128xf32>
    %215 = arith.index_cast %209 : i32 to index
    %c128_53 = arith.constant 128 : index
    %216 = vector.load %arg9[%215, %c128_53] : memref<16x256xf32, #tpu.memory_space<vmem>>, vector<2x128xf32>
    %217 = arith.addf %214, %216 : vector<2x128xf32>
    %218 = vector.extract_strided_slice %213 {offsets = [0, 0], sizes = [2, 96], strides = [1, 1]} : vector<2x128xf32> to vector<2x96xf32>
    %219 = arith.negf %218 : vector<2x96xf32>
    %220 = math.exp %219 : vector<2x96xf32>
    %cst_54 = arith.constant 1.000000e+00 : f32
    %221 = vector.broadcast %cst_54 : f32 to vector<2x96xf32>
    %222 = arith.addf %221, %220 : vector<2x96xf32>
    %223 = arith.divf %221, %222 : vector<2x96xf32>
    %224 = vector.extract_strided_slice %213 {offsets = [0, 96], sizes = [2, 32], strides = [1, 1]} : vector<2x128xf32> to vector<2x32xf32>
    %225 = math.tanh %224 : vector<2x32xf32>
    %226 = vector.extract_strided_slice %223 {offsets = [0, 32], sizes = [2, 32], strides = [1, 1]} : vector<2x96xf32> to vector<2x32xf32>
    %227 = arith.mulf %226, %181 : vector<2x32xf32>
    %228 = vector.extract_strided_slice %223 {offsets = [0, 0], sizes = [2, 32], strides = [1, 1]} : vector<2x96xf32> to vector<2x32xf32>
    %229 = arith.mulf %228, %225 : vector<2x32xf32>
    %230 = arith.addf %227, %229 : vector<2x32xf32>
    %231 = vector.extract_strided_slice %223 {offsets = [0, 64], sizes = [2, 32], strides = [1, 1]} : vector<2x96xf32> to vector<2x32xf32>
    %232 = math.tanh %230 : vector<2x32xf32>
    %233 = arith.mulf %231, %232 : vector<2x32xf32>
    %234 = vector.extract_strided_slice %217 {offsets = [0, 0], sizes = [2, 96], strides = [1, 1]} : vector<2x128xf32> to vector<2x96xf32>
    %235 = arith.negf %234 : vector<2x96xf32>
    %236 = math.exp %235 : vector<2x96xf32>
    %cst_55 = arith.constant 1.000000e+00 : f32
    %237 = vector.broadcast %cst_55 : f32 to vector<2x96xf32>
    %238 = arith.addf %237, %236 : vector<2x96xf32>
    %239 = arith.divf %237, %238 : vector<2x96xf32>
    %240 = vector.extract_strided_slice %217 {offsets = [0, 96], sizes = [2, 32], strides = [1, 1]} : vector<2x128xf32> to vector<2x32xf32>
    %241 = math.tanh %240 : vector<2x32xf32>
    %242 = vector.extract_strided_slice %239 {offsets = [0, 32], sizes = [2, 32], strides = [1, 1]} : vector<2x96xf32> to vector<2x32xf32>
    %243 = arith.mulf %242, %197 : vector<2x32xf32>
    %244 = vector.extract_strided_slice %239 {offsets = [0, 0], sizes = [2, 32], strides = [1, 1]} : vector<2x96xf32> to vector<2x32xf32>
    %245 = arith.mulf %244, %241 : vector<2x32xf32>
    %246 = arith.addf %243, %245 : vector<2x32xf32>
    %247 = vector.extract_strided_slice %239 {offsets = [0, 64], sizes = [2, 32], strides = [1, 1]} : vector<2x96xf32> to vector<2x32xf32>
    %248 = math.tanh %246 : vector<2x32xf32>
    %249 = arith.mulf %247, %248 : vector<2x32xf32>
    %250 = arith.index_cast %207 : i32 to index
    %c0_56 = arith.constant 0 : index
    %251 = vector.load %arg10[%250, %c0_56] : memref<16x64xf32, #tpu.memory_space<vmem>>, vector<2x32xf32>
    tpu.vector_store %arg10[%250, %c0_56], %233 {strides = array<i32>} : memref<16x64xf32, #tpu.memory_space<vmem>>, vector<2x32xf32>,
    %252 = arith.index_cast %209 : i32 to index
    %c32_57 = arith.constant 32 : index
    %253 = vector.load %arg10[%252, %c32_57] : memref<16x64xf32, #tpu.memory_space<vmem>>, vector<2x32xf32>
    tpu.vector_store %arg10[%252, %c32_57], %249 {strides = array<i32>} : memref<16x64xf32, #tpu.memory_space<vmem>>, vector<2x32xf32>,
    %254 = tpu.concatenate %233, %249 in 1 : vector<2x32xf32>, vector<2x32xf32> -> vector<2x64xf32>
    %c5_i32 = arith.constant 5 : i32
    %cst_58 = arith.constant dense<0.000000e+00> : vector<2x256xf32>
    %255 = tpu.matmul %254, %7, %cst_58 {dimension_numbers = #tpu.dot_dimension_numbers<[1], [0], [0], [1], [0, 0, 1, 1], [], []>} : vector<2x64xf32>, vector<64x256xf32>, vector<2x256xf32> -> vector<2x256xf32>
    %c2_i32_59 = arith.constant 2 : i32
    %256 = arith.muli %c5_i32, %c2_i32_59 : i32
    %c7_i32_60 = arith.constant 7 : i32
    %257 = arith.subi %c7_i32_60, %c5_i32 : i32
    %c2_i32_61 = arith.constant 2 : i32
    %258 = arith.muli %257, %c2_i32_61 : i32
    %259 = vector.extract_strided_slice %255 {offsets = [0, 0], sizes = [2, 128], strides = [1, 1]} : vector<2x256xf32> to vector<2x128xf32>
    %260 = arith.index_cast %256 : i32 to index
    %c0_62 = arith.constant 0 : index
    %261 = vector.load %arg9[%260, %c0_62] : memref<16x256xf32, #tpu.memory_space<vmem>>, vector<2x128xf32>
    %262 = arith.addf %259, %261 : vector<2x128xf32>
    %263 = vector.extract_strided_slice %255 {offsets = [0, 128], sizes = [2, 128], strides = [1, 1]} : vector<2x256xf32> to vector<2x128xf32>
    %264 = arith.index_cast %258 : i32 to index
    %c128_63 = arith.constant 128 : index
    %265 = vector.load %arg9[%264, %c128_63] : memref<16x256xf32, #tpu.memory_space<vmem>>, vector<2x128xf32>
    %266 = arith.addf %263, %265 : vector<2x128xf32>
    %267 = vector.extract_strided_slice %262 {offsets = [0, 0], sizes = [2, 96], strides = [1, 1]} : vector<2x128xf32> to vector<2x96xf32>
    %268 = arith.negf %267 : vector<2x96xf32>
    %269 = math.exp %268 : vector<2x96xf32>
    %cst_64 = arith.constant 1.000000e+00 : f32
    %270 = vector.broadcast %cst_64 : f32 to vector<2x96xf32>
    %271 = arith.addf %270, %269 : vector<2x96xf32>
    %272 = arith.divf %270, %271 : vector<2x96xf32>
    %273 = vector.extract_strided_slice %262 {offsets = [0, 96], sizes = [2, 32], strides = [1, 1]} : vector<2x128xf32> to vector<2x32xf32>
    %274 = math.tanh %273 : vector<2x32xf32>
    %275 = vector.extract_strided_slice %272 {offsets = [0, 32], sizes = [2, 32], strides = [1, 1]} : vector<2x96xf32> to vector<2x32xf32>
    %276 = arith.mulf %275, %230 : vector<2x32xf32>
    %277 = vector.extract_strided_slice %272 {offsets = [0, 0], sizes = [2, 32], strides = [1, 1]} : vector<2x96xf32> to vector<2x32xf32>
    %278 = arith.mulf %277, %274 : vector<2x32xf32>
    %279 = arith.addf %276, %278 : vector<2x32xf32>
    %280 = vector.extract_strided_slice %272 {offsets = [0, 64], sizes = [2, 32], strides = [1, 1]} : vector<2x96xf32> to vector<2x32xf32>
    %281 = math.tanh %279 : vector<2x32xf32>
    %282 = arith.mulf %280, %281 : vector<2x32xf32>
    %283 = vector.extract_strided_slice %266 {offsets = [0, 0], sizes = [2, 96], strides = [1, 1]} : vector<2x128xf32> to vector<2x96xf32>
    %284 = arith.negf %283 : vector<2x96xf32>
    %285 = math.exp %284 : vector<2x96xf32>
    %cst_65 = arith.constant 1.000000e+00 : f32
    %286 = vector.broadcast %cst_65 : f32 to vector<2x96xf32>
    %287 = arith.addf %286, %285 : vector<2x96xf32>
    %288 = arith.divf %286, %287 : vector<2x96xf32>
    %289 = vector.extract_strided_slice %266 {offsets = [0, 96], sizes = [2, 32], strides = [1, 1]} : vector<2x128xf32> to vector<2x32xf32>
    %290 = math.tanh %289 : vector<2x32xf32>
    %291 = vector.extract_strided_slice %288 {offsets = [0, 32], sizes = [2, 32], strides = [1, 1]} : vector<2x96xf32> to vector<2x32xf32>
    %292 = arith.mulf %291, %246 : vector<2x32xf32>
    %293 = vector.extract_strided_slice %288 {offsets = [0, 0], sizes = [2, 32], strides = [1, 1]} : vector<2x96xf32> to vector<2x32xf32>
    %294 = arith.mulf %293, %290 : vector<2x32xf32>
    %295 = arith.addf %292, %294 : vector<2x32xf32>
    %296 = vector.extract_strided_slice %288 {offsets = [0, 64], sizes = [2, 32], strides = [1, 1]} : vector<2x96xf32> to vector<2x32xf32>
    %297 = math.tanh %295 : vector<2x32xf32>
    %298 = arith.mulf %296, %297 : vector<2x32xf32>
    %299 = arith.index_cast %256 : i32 to index
    %c0_66 = arith.constant 0 : index
    %300 = vector.load %arg10[%299, %c0_66] : memref<16x64xf32, #tpu.memory_space<vmem>>, vector<2x32xf32>
    tpu.vector_store %arg10[%299, %c0_66], %282 {strides = array<i32>} : memref<16x64xf32, #tpu.memory_space<vmem>>, vector<2x32xf32>,
    %301 = arith.index_cast %258 : i32 to index
    %c32_67 = arith.constant 32 : index
    %302 = vector.load %arg10[%301, %c32_67] : memref<16x64xf32, #tpu.memory_space<vmem>>, vector<2x32xf32>
    tpu.vector_store %arg10[%301, %c32_67], %298 {strides = array<i32>} : memref<16x64xf32, #tpu.memory_space<vmem>>, vector<2x32xf32>,
    %303 = tpu.concatenate %282, %298 in 1 : vector<2x32xf32>, vector<2x32xf32> -> vector<2x64xf32>
    %c6_i32 = arith.constant 6 : i32
    %cst_68 = arith.constant dense<0.000000e+00> : vector<2x256xf32>
    %304 = tpu.matmul %303, %7, %cst_68 {dimension_numbers = #tpu.dot_dimension_numbers<[1], [0], [0], [1], [0, 0, 1, 1], [], []>} : vector<2x64xf32>, vector<64x256xf32>, vector<2x256xf32> -> vector<2x256xf32>
    %c2_i32_69 = arith.constant 2 : i32
    %305 = arith.muli %c6_i32, %c2_i32_69 : i32
    %c7_i32_70 = arith.constant 7 : i32
    %306 = arith.subi %c7_i32_70, %c6_i32 : i32
    %c2_i32_71 = arith.constant 2 : i32
    %307 = arith.muli %306, %c2_i32_71 : i32
    %308 = vector.extract_strided_slice %304 {offsets = [0, 0], sizes = [2, 128], strides = [1, 1]} : vector<2x256xf32> to vector<2x128xf32>
    %309 = arith.index_cast %305 : i32 to index
    %c0_72 = arith.constant 0 : index
    %310 = vector.load %arg9[%309, %c0_72] : memref<16x256xf32, #tpu.memory_space<vmem>>, vector<2x128xf32>
    %311 = arith.addf %308, %310 : vector<2x128xf32>
    %312 = vector.extract_strided_slice %304 {offsets = [0, 128], sizes = [2, 128], strides = [1, 1]} : vector<2x256xf32> to vector<2x128xf32>
    %313 = arith.index_cast %307 : i32 to index
    %c128_73 = arith.constant 128 : index
    %314 = vector.load %arg9[%313, %c128_73] : memref<16x256xf32, #tpu.memory_space<vmem>>, vector<2x128xf32>
    %315 = arith.addf %312, %314 : vector<2x128xf32>
    %316 = vector.extract_strided_slice %311 {offsets = [0, 0], sizes = [2, 96], strides = [1, 1]} : vector<2x128xf32> to vector<2x96xf32>
    %317 = arith.negf %316 : vector<2x96xf32>
    %318 = math.exp %317 : vector<2x96xf32>
    %cst_74 = arith.constant 1.000000e+00 : f32
    %319 = vector.broadcast %cst_74 : f32 to vector<2x96xf32>
    %320 = arith.addf %319, %318 : vector<2x96xf32>
    %321 = arith.divf %319, %320 : vector<2x96xf32>
    %322 = vector.extract_strided_slice %311 {offsets = [0, 96], sizes = [2, 32], strides = [1, 1]} : vector<2x128xf32> to vector<2x32xf32>
    %323 = math.tanh %322 : vector<2x32xf32>
    %324 = vector.extract_strided_slice %321 {offsets = [0, 32], sizes = [2, 32], strides = [1, 1]} : vector<2x96xf32> to vector<2x32xf32>
    %325 = arith.mulf %324, %279 : vector<2x32xf32>
    %326 = vector.extract_strided_slice %321 {offsets = [0, 0], sizes = [2, 32], strides = [1, 1]} : vector<2x96xf32> to vector<2x32xf32>
    %327 = arith.mulf %326, %323 : vector<2x32xf32>
    %328 = arith.addf %325, %327 : vector<2x32xf32>
    %329 = vector.extract_strided_slice %321 {offsets = [0, 64], sizes = [2, 32], strides = [1, 1]} : vector<2x96xf32> to vector<2x32xf32>
    %330 = math.tanh %328 : vector<2x32xf32>
    %331 = arith.mulf %329, %330 : vector<2x32xf32>
    %332 = vector.extract_strided_slice %315 {offsets = [0, 0], sizes = [2, 96], strides = [1, 1]} : vector<2x128xf32> to vector<2x96xf32>
    %333 = arith.negf %332 : vector<2x96xf32>
    %334 = math.exp %333 : vector<2x96xf32>
    %cst_75 = arith.constant 1.000000e+00 : f32
    %335 = vector.broadcast %cst_75 : f32 to vector<2x96xf32>
    %336 = arith.addf %335, %334 : vector<2x96xf32>
    %337 = arith.divf %335, %336 : vector<2x96xf32>
    %338 = vector.extract_strided_slice %315 {offsets = [0, 96], sizes = [2, 32], strides = [1, 1]} : vector<2x128xf32> to vector<2x32xf32>
    %339 = math.tanh %338 : vector<2x32xf32>
    %340 = vector.extract_strided_slice %337 {offsets = [0, 32], sizes = [2, 32], strides = [1, 1]} : vector<2x96xf32> to vector<2x32xf32>
    %341 = arith.mulf %340, %295 : vector<2x32xf32>
    %342 = vector.extract_strided_slice %337 {offsets = [0, 0], sizes = [2, 32], strides = [1, 1]} : vector<2x96xf32> to vector<2x32xf32>
    %343 = arith.mulf %342, %339 : vector<2x32xf32>
    %344 = arith.addf %341, %343 : vector<2x32xf32>
    %345 = vector.extract_strided_slice %337 {offsets = [0, 64], sizes = [2, 32], strides = [1, 1]} : vector<2x96xf32> to vector<2x32xf32>
    %346 = math.tanh %344 : vector<2x32xf32>
    %347 = arith.mulf %345, %346 : vector<2x32xf32>
    %348 = arith.index_cast %305 : i32 to index
    %c0_76 = arith.constant 0 : index
    %349 = vector.load %arg10[%348, %c0_76] : memref<16x64xf32, #tpu.memory_space<vmem>>, vector<2x32xf32>
    tpu.vector_store %arg10[%348, %c0_76], %331 {strides = array<i32>} : memref<16x64xf32, #tpu.memory_space<vmem>>, vector<2x32xf32>,
    %350 = arith.index_cast %307 : i32 to index
    %c32_77 = arith.constant 32 : index
    %351 = vector.load %arg10[%350, %c32_77] : memref<16x64xf32, #tpu.memory_space<vmem>>, vector<2x32xf32>
    tpu.vector_store %arg10[%350, %c32_77], %347 {strides = array<i32>} : memref<16x64xf32, #tpu.memory_space<vmem>>, vector<2x32xf32>,
    %352 = tpu.concatenate %331, %347 in 1 : vector<2x32xf32>, vector<2x32xf32> -> vector<2x64xf32>
    %c7_i32_78 = arith.constant 7 : i32
    %cst_79 = arith.constant dense<0.000000e+00> : vector<2x256xf32>
    %353 = tpu.matmul %352, %7, %cst_79 {dimension_numbers = #tpu.dot_dimension_numbers<[1], [0], [0], [1], [0, 0, 1, 1], [], []>} : vector<2x64xf32>, vector<64x256xf32>, vector<2x256xf32> -> vector<2x256xf32>
    %c2_i32_80 = arith.constant 2 : i32
    %354 = arith.muli %c7_i32_78, %c2_i32_80 : i32
    %c7_i32_81 = arith.constant 7 : i32
    %355 = arith.subi %c7_i32_81, %c7_i32_78 : i32
    %c2_i32_82 = arith.constant 2 : i32
    %356 = arith.muli %355, %c2_i32_82 : i32
    %357 = vector.extract_strided_slice %353 {offsets = [0, 0], sizes = [2, 128], strides = [1, 1]} : vector<2x256xf32> to vector<2x128xf32>
    %358 = arith.index_cast %354 : i32 to index
    %c0_83 = arith.constant 0 : index
    %359 = vector.load %arg9[%358, %c0_83] : memref<16x256xf32, #tpu.memory_space<vmem>>, vector<2x128xf32>
    %360 = arith.addf %357, %359 : vector<2x128xf32>
    %361 = vector.extract_strided_slice %353 {offsets = [0, 128], sizes = [2, 128], strides = [1, 1]} : vector<2x256xf32> to vector<2x128xf32>
    %362 = arith.index_cast %356 : i32 to index
    %c128_84 = arith.constant 128 : index
    %363 = vector.load %arg9[%362, %c128_84] : memref<16x256xf32, #tpu.memory_space<vmem>>, vector<2x128xf32>
    %364 = arith.addf %361, %363 : vector<2x128xf32>
    %365 = vector.extract_strided_slice %360 {offsets = [0, 0], sizes = [2, 96], strides = [1, 1]} : vector<2x128xf32> to vector<2x96xf32>
    %366 = arith.negf %365 : vector<2x96xf32>
    %367 = math.exp %366 : vector<2x96xf32>
    %cst_85 = arith.constant 1.000000e+00 : f32
    %368 = vector.broadcast %cst_85 : f32 to vector<2x96xf32>
    %369 = arith.addf %368, %367 : vector<2x96xf32>
    %370 = arith.divf %368, %369 : vector<2x96xf32>
    %371 = vector.extract_strided_slice %360 {offsets = [0, 96], sizes = [2, 32], strides = [1, 1]} : vector<2x128xf32> to vector<2x32xf32>
    %372 = math.tanh %371 : vector<2x32xf32>
    %373 = vector.extract_strided_slice %370 {offsets = [0, 32], sizes = [2, 32], strides = [1, 1]} : vector<2x96xf32> to vector<2x32xf32>
    %374 = arith.mulf %373, %328 : vector<2x32xf32>
    %375 = vector.extract_strided_slice %370 {offsets = [0, 0], sizes = [2, 32], strides = [1, 1]} : vector<2x96xf32> to vector<2x32xf32>
    %376 = arith.mulf %375, %372 : vector<2x32xf32>
    %377 = arith.addf %374, %376 : vector<2x32xf32>
    %378 = vector.extract_strided_slice %370 {offsets = [0, 64], sizes = [2, 32], strides = [1, 1]} : vector<2x96xf32> to vector<2x32xf32>
    %379 = math.tanh %377 : vector<2x32xf32>
    %380 = arith.mulf %378, %379 : vector<2x32xf32>
    %381 = vector.extract_strided_slice %364 {offsets = [0, 0], sizes = [2, 96], strides = [1, 1]} : vector<2x128xf32> to vector<2x96xf32>
    %382 = arith.negf %381 : vector<2x96xf32>
    %383 = math.exp %382 : vector<2x96xf32>
    %cst_86 = arith.constant 1.000000e+00 : f32
    %384 = vector.broadcast %cst_86 : f32 to vector<2x96xf32>
    %385 = arith.addf %384, %383 : vector<2x96xf32>
    %386 = arith.divf %384, %385 : vector<2x96xf32>
    %387 = vector.extract_strided_slice %364 {offsets = [0, 96], sizes = [2, 32], strides = [1, 1]} : vector<2x128xf32> to vector<2x32xf32>
    %388 = math.tanh %387 : vector<2x32xf32>
    %389 = vector.extract_strided_slice %386 {offsets = [0, 32], sizes = [2, 32], strides = [1, 1]} : vector<2x96xf32> to vector<2x32xf32>
    %390 = arith.mulf %389, %344 : vector<2x32xf32>
    %391 = vector.extract_strided_slice %386 {offsets = [0, 0], sizes = [2, 32], strides = [1, 1]} : vector<2x96xf32> to vector<2x32xf32>
    %392 = arith.mulf %391, %388 : vector<2x32xf32>
    %393 = arith.addf %390, %392 : vector<2x32xf32>
    %394 = vector.extract_strided_slice %386 {offsets = [0, 64], sizes = [2, 32], strides = [1, 1]} : vector<2x96xf32> to vector<2x32xf32>
    %395 = math.tanh %393 : vector<2x32xf32>
    %396 = arith.mulf %394, %395 : vector<2x32xf32>
    %397 = arith.index_cast %354 : i32 to index
    %c0_87 = arith.constant 0 : index
    %398 = vector.load %arg10[%397, %c0_87] : memref<16x64xf32, #tpu.memory_space<vmem>>, vector<2x32xf32>
    tpu.vector_store %arg10[%397, %c0_87], %380 {strides = array<i32>} : memref<16x64xf32, #tpu.memory_space<vmem>>, vector<2x32xf32>,
    %399 = arith.index_cast %356 : i32 to index
    %c32_88 = arith.constant 32 : index
    %400 = vector.load %arg10[%399, %c32_88] : memref<16x64xf32, #tpu.memory_space<vmem>>, vector<2x32xf32>
    tpu.vector_store %arg10[%399, %c32_88], %396 {strides = array<i32>} : memref<16x64xf32, #tpu.memory_space<vmem>>, vector<2x32xf32>,
    %401 = tpu.concatenate %380, %396 in 1 : vector<2x32xf32>, vector<2x32xf32> -> vector<2x64xf32>
    %c8_i32 = arith.constant 8 : i32
    %c0_89 = arith.constant 0 : index
    %c0_90 = arith.constant 0 : index
    %402 = vector.load %arg10[%c0_89, %c0_90] : memref<16x64xf32, #tpu.memory_space<vmem>>, vector<16x64xf32>
    %c0_91 = arith.constant 0 : index
    %c0_92 = arith.constant 0 : index
    %403 = vector.load %arg4[%c0_91, %c0_92] : memref<64x64xf32, #tpu.memory_space<vmem>>, vector<64x64xf32>
    %cst_93 = arith.constant dense<0.000000e+00> : vector<16x64xf32>
    %404 = tpu.matmul %402, %403, %cst_93 {dimension_numbers = #tpu.dot_dimension_numbers<[1], [0], [0], [1], [0, 0, 1, 1], [], []>} : vector<16x64xf32>, vector<64x64xf32>, vector<16x64xf32> -> vector<16x64xf32>
    %c0_94 = arith.constant 0 : index
    %c0_95 = arith.constant 0 : index
    %405 = vector.load %arg5[%c0_94, %c0_95] : memref<1x64xf32, #tpu.memory_space<vmem>>, vector<1x64xf32>
    %406 = vector.broadcast %405 : vector<1x64xf32> to vector<16x64xf32>
    %407 = arith.addf %404, %406 : vector<16x64xf32>
    %408 = math.tanh %407 : vector<16x64xf32>
    %c0_96 = arith.constant 0 : index
    %c0_97 = arith.constant 0 : index
    %409 = vector.load %arg6[%c0_96, %c0_97] : memref<64x128xf32, #tpu.memory_space<vmem>>, vector<64x128xf32>
    %cst_98 = arith.constant dense<0.000000e+00> : vector<16x128xf32>
    %410 = tpu.matmul %408, %409, %cst_98 {dimension_numbers = #tpu.dot_dimension_numbers<[1], [0], [0], [1], [0, 0, 1, 1], [], []>} : vector<16x64xf32>, vector<64x128xf32>, vector<16x128xf32> -> vector<16x128xf32>
    %c0_99 = arith.constant 0 : index
    %c0_100 = arith.constant 0 : index
    %411 = vector.load %arg7[%c0_99, %c0_100] : memref<1x128xf32, #tpu.memory_space<vmem>>, vector<1x128xf32>
    %412 = vector.broadcast %411 : vector<1x128xf32> to vector<16x128xf32>
    %413 = arith.addf %410, %412 : vector<16x128xf32>
    %c0_101 = arith.constant 0 : index
    %c0_102 = arith.constant 0 : index
    %414 = vector.load %arg8[%c0_101, %c0_102] : memref<16x128xf32, #tpu.memory_space<vmem>>, vector<16x128xf32>
    tpu.vector_store %arg8[%c0_101, %c0_102], %413 {strides = array<i32>} : memref<16x128xf32, #tpu.memory_space<vmem>>, vector<16x128xf32>,
    return
  }
}

</mosaic_0001>

<llo_original>
// kernel: ner_lstm_forward.1
$region0: #{ner_lstm_forward.1}
  #allocation0 [shape = 'u32[]', space=smem, size = 0x4, offset = 0x4, fixed_abs, tag = 'smem constant byte address 0x4 - core index']
  #allocation1 [shape = 'u32[144,128]{1,0:T(1,128)}', space=vmem, size = 0x12000, scoped, tag = 'internal scratch']
  #allocation2 [shape = 'f32[16,256]{1,0:T(8,128)}', space=vmem, size = 0x4000, scoped, tag = 'scratch operand']
  #allocation3 [shape = 'f32[16,64]{1,0:T(8,128)}', space=vmem, size = 0x2000, scoped, tag = 'scratch operand']
  %s0 = inlined_call_operand.vmem [shape: f32[16,16], index: 0, kind: input, shape index: {}]
  %s1 = inlined_call_operand.vmem [shape: f32[16,256], index: 1, kind: input, shape index: {}]
  %s2 = inlined_call_operand.vmem [shape: f32[64,256], index: 2, kind: input, shape index: {}]
  %s3 = inlined_call_operand.vmem [shape: f32[1,256], index: 3, kind: input, shape index: {}]
  %s4 = inlined_call_operand.vmem [shape: f32[64,64], index: 4, kind: input, shape index: {}]
  %s5 = inlined_call_operand.vmem [shape: f32[1,64], index: 5, kind: input, shape index: {}]
  %s6 = inlined_call_operand.vmem [shape: f32[64,128], index: 6, kind: input, shape index: {}]
  %s7 = inlined_call_operand.vmem [shape: f32[1,128], index: 7, kind: input, shape index: {}]
  %s8 = inlined_call_operand.vmem [shape: f32[16,128], index: 8, kind: output, shape index: {}]
  %s9 = sld [smem:[#allocation0]]
  $region42: #{ner_lstm_forward.1} parent=0
    _
  %s11 = ssub.s32 1, %s9
  %s12 = scalar_select 0, %s11, %s9
  // Predicated region
  $region2: #{ner_lstm_forward.1} parent=0 // pred_check
    _
  $region3: #{ner_lstm_forward.1} parent=0 // pred_check_branch
    %14 = sbr.rel (0) target = $region5
  $region4: #{ner_lstm_forward.1} parent=0 // pred_region
    _
  $region5: #{ner_lstm_forward.1} parent=0 // pred_fallthru
    _
  // Predicated region
  $region6: #{ner_lstm_forward.1} parent=0 // pred_check
    _
  $region7: #{ner_lstm_forward.1} parent=0 // pred_check_branch
    %16 = sbr.rel (0) target = $region9
  $region8: #{ner_lstm_forward.1} parent=0 // pred_region
    _
  $region9: #{ner_lstm_forward.1} parent=0 // pred_fallthru
    _
  // Predicated region
  $region10: #{ner_lstm_forward.1} parent=0 // pred_check
    _
  $region11: #{ner_lstm_forward.1} parent=0 // pred_check_branch
    %18 = sbr.rel (0) target = $region13
  $region12: #{ner_lstm_forward.1} parent=0 // pred_region
    _
  $region13: #{ner_lstm_forward.1} parent=0 // pred_fallthru
    _
  // Predicated region
  $region14: #{ner_lstm_forward.1} parent=0 // pred_check
    _
  $region15: #{ner_lstm_forward.1} parent=0 // pred_check_branch
    %20 = sbr.rel (0) target = $region17
  $region16: #{ner_lstm_forward.1} parent=0 // pred_region
    _
  $region17: #{ner_lstm_forward.1} parent=0 // pred_fallthru
    _
  // Predicated region
  $region18: #{ner_lstm_forward.1} parent=0 // pred_check
    _
  $region19: #{ner_lstm_forward.1} parent=0 // pred_check_branch
    %22 = sbr.rel (0) target = $region21
  $region20: #{ner_lstm_forward.1} parent=0 // pred_region
    _
  $region21: #{ner_lstm_forward.1} parent=0 // pred_fallthru
    _
  // Predicated region
  $region22: #{ner_lstm_forward.1} parent=0 // pred_check
    _
  $region23: #{ner_lstm_forward.1} parent=0 // pred_check_branch
    %24 = sbr.rel (0) target = $region25
  $region24: #{ner_lstm_forward.1} parent=0 // pred_region
    _
  $region25: #{ner_lstm_forward.1} parent=0 // pred_fallthru
    _
  // Predicated region
  $region26: #{ner_lstm_forward.1} parent=0 // pred_check
    _
  $region27: #{ner_lstm_forward.1} parent=0 // pred_check_branch
    %26 = sbr.rel (0) target = $region29
  $region28: #{ner_lstm_forward.1} parent=0 // pred_region
    _
  $region29: #{ner_lstm_forward.1} parent=0 // pred_fallthru
    _
  // Predicated region
  $region30: #{ner_lstm_forward.1} parent=0 // pred_check
    _
  $region31: #{ner_lstm_forward.1} parent=0 // pred_check_branch
    %28 = sbr.rel (0) target = $region33
  $region32: #{ner_lstm_forward.1} parent=0 // pred_region
    _
  $region33: #{ner_lstm_forward.1} parent=0 // pred_fallthru
    _
  %v29 = vld [vmem:[%s0] sm:$0xff]
  %v30 = vld [vmem:[%s0 + $0x8] sm:$0xff]
  %v31 = vld [vmem:[%s1] sm:$0xff]
  %v32 = vld [vmem:[%s1 + $0x8] sm:$0xff]
  %v33 = vld [vmem:[%s1 + $0x10] sm:$0xff]
  %v34 = vld [vmem:[%s1 + $0x18] sm:$0xff]
  %v35 = vld [vmem:[%s3] sm:$0x3]
  %v37 = vlaneseq
  %v38 = vshrl.u32 %v37, 7
  %v39 = vsub.s32 0, %v38
  %v40 = vrot.slane %v35, %v39
  %v41 = vlaneseq
  %v42 = vshrl.u32 %v41, 7
  %v43 = vsub.s32 1, %v42
  %v44 = vrot.slane %v35, %v43
  %vm47 = vcmask 130048
  %v49 = vsel %vm47, %v29, 0
  %v52 = vsel %vm47, %v30, 0
  %54 = vmatprep.subr.mxu0 0.0
  %55 = vmatpush1.msra.mxu0 0.0
  %56 = vmatprep.subr.mxu0 0.0
  %57 = vmatpush1.msra.mxu0 0.0
  %58 = vmatprep.subr.mxu0 0.0
  %59 = vmatpush1.msra.mxu0 0.0
  %60 = vmatprep.subr.mxu0 0.0
  %61 = vmatpush1.msra.mxu0 0.0
  %62 = vmatprep.subr.mxu0 0.0
  %63 = vmatpush1.msra.mxu0 0.0
  %64 = vmatprep.subr.mxu0 0.0
  %65 = vmatpush1.msra.mxu0 0.0
  %66 = vmatprep.subr.mxu0 0.0
  %67 = vmatpush1.msra.mxu0 0.0
  %68 = vmatprep.subr.mxu0 0.0
  %69 = vmatpush1.msra.mxu0 0.0
  %70 = vmatprep.subr.mxu0 0.0
  %71 = vmatpush1.msra.mxu0 0.0
  %72 = vmatprep.subr.mxu0 0.0
  %73 = vmatpush1.msra.mxu0 0.0
  %74 = vmatprep.subr.mxu0 0.0
  %75 = vmatpush1.msra.mxu0 0.0
  %76 = vmatprep.subr.mxu0 0.0
  %77 = vmatpush1.msra.mxu0 0.0
  %78 = vmatprep.subr.mxu0 0.0
  %79 = vmatpush1.msra.mxu0 0.0
  %80 = vmatprep.subr.mxu0 0.0
  %81 = vmatpush1.msra.mxu0 0.0
  %82 = vmatprep.subr.mxu0 %v34
  %83 = vmatpush1.msra.mxu0 %v33
  %84 = vmatprep.subr.mxu0 %v32
  %85 = vmatpush1.msra.mxu0 %v31
  %86 = vmatprep.subr.mxu0 0.0
  %87 = vmatpush2.msra.mxu0 0.0
  %88 = vmatprep.subr.mxu0 0.0
  %89 = vmatpush2.msra.mxu0 0.0
  %90 = vmatprep.subr.mxu0 0.0
  %91 = vmatpush2.msra.mxu0 0.0
  %92 = vmatprep.subr.mxu0 0.0
  %93 = vmatpush2.msra.mxu0 0.0
  %94 = vmatprep.subr.mxu0 0.0
  %95 = vmatpush2.msra.mxu0 0.0
  %96 = vmatprep.subr.mxu0 0.0
  %97 = vmatpush2.msra.mxu0 0.0
  %98 = vmatprep.subr.mxu0 0.0
  %99 = vmatpush2.msra.mxu0 0.0
  %100 = vmatprep.subr.mxu0 0.0
  %101 = vmatpush2.msra.mxu0 0.0
  %102 = vmatprep.subr.mxu0 0.0
  %103 = vmatpush2.msra.mxu0 0.0
  %104 = vmatprep.subr.mxu0 0.0
  %105 = vmatpush2.msra.mxu0 0.0
  %106 = vmatprep.subr.mxu0 0.0
  %107 = vmatpush2.msra.mxu0 0.0
  %108 = vmatprep.subr.mxu0 0.0
  %109 = vmatpush2.msra.mxu0 0.0
  %110 = vmatprep.subr.mxu0 0.0
  %111 = vmatpush2.msra.mxu0 0.0
  %112 = vmatprep.subr.mxu0 0.0
  %113 = vmatpush2.msra.mxu0 0.0
  %114 = vmatprep.subr.mxu0 0.0
  %115 = vmatpush2.msra.mxu0 0.0
  %116 = vmatprep.subr.mxu0 0.0
  %117 = vmatpush2.msra.mxu0 0.0
  %118 = vmatprep.mubr.f32.mxu0 0.0
  %119 = vmatmul.mubr.f32.gmra.mxu0 %v49
  %v120 = vpop.f32.mrf.mxu0
  %v121 = vadd.f32 %v40, %v120
  %v122 = vpop.f32.mrf.mxu0
  %v123 = vadd.f32 %v44, %v122
  %124 = vmatprep.mubr.f32.mxu0 0.0
  %125 = vmatmul.mubr.f32.gmra.mxu0 %v52
  %v126 = vpop.f32.mrf.mxu0
  %v127 = vadd.f32 %v40, %v126
  %v128 = vpop.f32.mrf.mxu0
  %v129 = vadd.f32 %v44, %v128
  %130 = vdwg.mxu0
  %131 = vst [vmem:[#allocation2] sm:$0xff] %v121
  %132 = vst [vmem:[#allocation2 + $0x8] sm:$0xff] %v123
  %133 = vst [vmem:[#allocation2 + $0x10] sm:$0xff] %v127
  %134 = vst [vmem:[#allocation2 + $0x18] sm:$0xff] %v129
  %v135 = vld [vmem:[%s2] sm:$0xff]
  %v136 = vld [vmem:[%s2 + $0x8] sm:$0xff]
  %v137 = vld [vmem:[%s2 + $0x10] sm:$0xff]
  %v138 = vld [vmem:[%s2 + $0x18] sm:$0xff]
  %v139 = vld [vmem:[%s2 + $0x20] sm:$0xff]
  %v140 = vld [vmem:[%s2 + $0x28] sm:$0xff]
  %v141 = vld [vmem:[%s2 + $0x30] sm:$0xff]
  %v142 = vld [vmem:[%s2 + $0x38] sm:$0xff]
  %v143 = vld [vmem:[%s2 + $0x40] sm:$0xff]
  %v144 = vld [vmem:[%s2 + $0x48] sm:$0xff]
  %v145 = vld [vmem:[%s2 + $0x50] sm:$0xff]
  %v146 = vld [vmem:[%s2 + $0x58] sm:$0xff]
  %v147 = vld [vmem:[%s2 + $0x60] sm:$0xff]
  %v148 = vld [vmem:[%s2 + $0x68] sm:$0xff]
  %v149 = vld [vmem:[%s2 + $0x70] sm:$0xff]
  %v150 = vld [vmem:[%s2 + $0x78] sm:$0xff]
  %vm151 = vcmask 523264
  %v153 = vsel %vm151, 0.0, 0
  %155 = vmatprep.subr.mxu0 0.0
  %156 = vmatpush1.msra.mxu0 0.0
  %157 = vmatprep.subr.mxu0 0.0
  %158 = vmatpush1.msra.mxu0 0.0
  %159 = vmatprep.subr.mxu0 0.0
  %160 = vmatpush1.msra.mxu0 0.0
  %161 = vmatprep.subr.mxu0 0.0
  %162 = vmatpush1.msra.mxu0 0.0
  %163 = vmatprep.subr.mxu0 0.0
  %164 = vmatpush1.msra.mxu0 0.0
  %165 = vmatprep.subr.mxu0 0.0
  %166 = vmatpush1.msra.mxu0 0.0
  %167 = vmatprep.subr.mxu0 0.0
  %168 = vmatpush1.msra.mxu0 0.0
  %169 = vmatprep.subr.mxu0 0.0
  %170 = vmatpush1.msra.mxu0 0.0
  %171 = vmatprep.subr.mxu0 %v150
  %172 = vmatpush1.msra.mxu0 %v149
  %173 = vmatprep.subr.mxu0 %v148
  %174 = vmatpush1.msra.mxu0 %v147
  %175 = vmatprep.subr.mxu0 %v146
  %176 = vmatpush1.msra.mxu0 %v145
  %177 = vmatprep.subr.mxu0 %v144
  %178 = vmatpush1.msra.mxu0 %v143
  %179 = vmatprep.subr.mxu0 %v142
  %180 = vmatpush1.msra.mxu0 %v141
  %181 = vmatprep.subr.mxu0 %v140
  %182 = vmatpush1.msra.mxu0 %v139
  %183 = vmatprep.subr.mxu0 %v138
  %184 = vmatpush1.msra.mxu0 %v137
  %185 = vmatprep.subr.mxu0 %v136
  %186 = vmatpush1.msra.mxu0 %v135
  %187 = vmatprep.subr.mxu0 0.0
  %188 = vmatpush2.msra.mxu0 0.0
  %189 = vmatprep.subr.mxu0 0.0
  %190 = vmatpush2.msra.mxu0 0.0
  %191 = vmatprep.subr.mxu0 0.0
  %192 = vmatpush2.msra.mxu0 0.0
  %193 = vmatprep.subr.mxu0 0.0
  %194 = vmatpush2.msra.mxu0 0.0
  %195 = vmatprep.subr.mxu0 0.0
  %196 = vmatpush2.msra.mxu0 0.0
  %197 = vmatprep.subr.mxu0 0.0
  %198 = vmatpush2.msra.mxu0 0.0
  %199 = vmatprep.subr.mxu0 0.0
  %200 = vmatpush2.msra.mxu0 0.0
  %201 = vmatprep.subr.mxu0 0.0
  %202 = vmatpush2.msra.mxu0 0.0
  %203 = vmatprep.subr.mxu0 0.0
  %204 = vmatpush2.msra.mxu0 0.0
  %205 = vmatprep.subr.mxu0 0.0
  %206 = vmatpush2.msra.mxu0 0.0
  %207 = vmatprep.subr.mxu0 0.0
  %208 = vmatpush2.msra.mxu0 0.0
  %209 = vmatprep.subr.mxu0 0.0
  %210 = vmatpush2.msra.mxu0 0.0
  %211 = vmatprep.subr.mxu0 0.0
  %212 = vmatpush2.msra.mxu0 0.0
  %213 = vmatprep.subr.mxu0 0.0
  %214 = vmatpush2.msra.mxu0 0.0
  %215 = vmatprep.subr.mxu0 0.0
  %216 = vmatpush2.msra.mxu0 0.0
  %217 = vmatprep.subr.mxu0 0.0
  %218 = vmatpush2.msra.mxu0 0.0
  %219 = vmatprep.mubr.f32.mxu0 0.0
  %220 = vmatmul.mubr.f32.gmra.mxu0 %v153
  %v221 = vpop.f32.mrf.mxu0
  %v222 = vadd.f32 0.0, %v221
  %v223 = vpop.f32.mrf.mxu0
  %v224 = vadd.f32 0.0, %v223
  %225 = vdwg.mxu0
  %v226 = vld [vmem:[#allocation2] sm:$0x3]
  %v227 = vadd.f32 %v222, %v226
  %v228 = vld [vmem:[#allocation2 + $0x18] sm:$0xc0]
  %v230 = vrot.slane %v228, 6
  %v232 = vadd.f32 %v224, %v230
  %v233 = vxor.u32 %v227, 2147483648
  %v234 = vmul.f32 %v233, 1.442695
  %v235 = vpow.pop %v234
  %v236 = vadd.f32 %v235, 1.0
  %v237 = vrcp.pop %v236
  %v238 = vmul.f32 1.0, %v237
  %v239 = vtanh.pop %v227
  %v240 = vmul.f32 %v238, 0.0
  %242 = vrot.lane.b32.xlu0 %v239, 32
  %v243 = vpop.permute.xlu0 %242
  %v245 = vmul.f32 %v238, %v243
  %247 = vrot.lane.b32.xlu0 %v245, 32
  %v248 = vpop.permute.xlu0 %247
  %v250 = vadd.f32 %v240, %v248
  %v251 = vtanh.pop %v250
  %253 = vrot.lane.b32.xlu0 %v251, 32
  %v254 = vpop.permute.xlu0 %253
  %v256 = vmul.f32 %v238, %v254
  %v257 = vxor.u32 %v232, 2147483648
  %v258 = vmul.f32 %v257, 1.442695
  %v259 = vpow.pop %v258
  %v260 = vadd.f32 %v259, 1.0
  %v261 = vrcp.pop %v260
  %v262 = vmul.f32 1.0, %v261
  %v263 = vtanh.pop %v232
  %v264 = vmul.f32 %v262, 0.0
  %266 = vrot.lane.b32.xlu0 %v263, 32
  %v267 = vpop.permute.xlu0 %266
  %v269 = vmul.f32 %v262, %v267
  %271 = vrot.lane.b32.xlu0 %v269, 32
  %v272 = vpop.permute.xlu0 %271
  %v274 = vadd.f32 %v264, %v272
  %v275 = vtanh.pop %v274
  %277 = vrot.lane.b32.xlu0 %v275, 32
  %v278 = vpop.permute.xlu0 %277
  %v280 = vmul.f32 %v262, %v278
  %282 = vrot.lane.b32.xlu0 %v256, 64
  %v283 = vpop.permute.xlu0 %282
  %vm285 = vcmask 254976
  %286 = vst.msk [vmem:[#allocation3] sm:$0x3] %vm285, %v283
  %288 = vrot.lane.b32.xlu0 %v280, 96
  %v289 = vpop.permute.xlu0 %288
  %vm291 = vcmask 517376
  %292 = vst.msk [vmem:[#allocation3 + $0xe] sm:$0x3] %vm291, %v289
  %vm293 = vcmask 261120
  %v294 = vsel %vm293, %v283, %v289
  %v296 = vsel %vm151, %v294, 0
  %298 = vmatprep.subr.mxu0 0.0
  %299 = vmatpush1.msra.mxu0 0.0
  %300 = vmatprep.subr.mxu0 0.0
  %301 = vmatpush1.msra.mxu0 0.0
  %302 = vmatprep.subr.mxu0 0.0
  %303 = vmatpush1.msra.mxu0 0.0
  %304 = vmatprep.subr.mxu0 0.0
  %305 = vmatpush1.msra.mxu0 0.0
  %306 = vmatprep.subr.mxu0 0.0
  %307 = vmatpush1.msra.mxu0 0.0
  %308 = vmatprep.subr.mxu0 0.0
  %309 = vmatpush1.msra.mxu0 0.0
  %310 = vmatprep.subr.mxu0 0.0
  %311 = vmatpush1.msra.mxu0 0.0
  %312 = vmatprep.subr.mxu0 0.0
  %313 = vmatpush1.msra.mxu0 0.0
  %314 = vmatprep.subr.mxu0 %v150
  %315 = vmatpush1.msra.mxu0 %v149
  %316 = vmatprep.subr.mxu0 %v148
  %317 = vmatpush1.msra.mxu0 %v147
  %318 = vmatprep.subr.mxu0 %v146
  %319 = vmatpush1.msra.mxu0 %v145
  %320 = vmatprep.subr.mxu0 %v144
  %321 = vmatpush1.msra.mxu0 %v143
  %322 = vmatprep.subr.mxu0 %v142
  %323 = vmatpush1.msra.mxu0 %v141
  %324 = vmatprep.subr.mxu0 %v140
  %325 = vmatpush1.msra.mxu0 %v139
  %326 = vmatprep.subr.mxu0 %v138
  %327 = vmatpush1.msra.mxu0 %v137
  %328 = vmatprep.subr.mxu0 %v136
  %329 = vmatpush1.msra.mxu0 %v135
  %330 = vmatprep.subr.mxu0 0.0
  %331 = vmatpush2.msra.mxu0 0.0
  %332 = vmatprep.subr.mxu0 0.0
  %333 = vmatpush2.msra.mxu0 0.0
  %334 = vmatprep.subr.mxu0 0.0
  %335 = vmatpush2.msra.mxu0 0.0
  %336 = vmatprep.subr.mxu0 0.0
  %337 = vmatpush2.msra.mxu0 0.0
  %338 = vmatprep.subr.mxu0 0.0
  %339 = vmatpush2.msra.mxu0 0.0
  %340 = vmatprep.subr.mxu0 0.0
  %341 = vmatpush2.msra.mxu0 0.0
  %342 = vmatprep.subr.mxu0 0.0
  %343 = vmatpush2.msra.mxu0 0.0
  %344 = vmatprep.subr.mxu0 0.0
  %345 = vmatpush2.msra.mxu0 0.0
  %346 = vmatprep.subr.mxu0 0.0
  %347 = vmatpush2.msra.mxu0 0.0
  %348 = vmatprep.subr.mxu0 0.0
  %349 = vmatpush2.msra.mxu0 0.0
  %350 = vmatprep.subr.mxu0 0.0
  %351 = vmatpush2.msra.mxu0 0.0
  %352 = vmatprep.subr.mxu0 0.0
  %353 = vmatpush2.msra.mxu0 0.0
  %354 = vmatprep.subr.mxu0 0.0
  %355 = vmatpush2.msra.mxu0 0.0
  %356 = vmatprep.subr.mxu0 0.0
  %357 = vmatpush2.msra.mxu0 0.0
  %358 = vmatprep.subr.mxu0 0.0
  %359 = vmatpush2.msra.mxu0 0.0
  %360 = vmatprep.subr.mxu0 0.0
  %361 = vmatpush2.msra.mxu0 0.0
  %362 = vmatprep.mubr.f32.mxu0 0.0
  %363 = vmatmul.mubr.f32.gmra.mxu0 %v296
  %v364 = vpop.f32.mrf.mxu0
  %v365 = vadd.f32 0.0, %v364
  %v366 = vpop.f32.mrf.mxu0
  %v367 = vadd.f32 0.0, %v366
  %368 = vdwg.mxu0
  %v369 = vld [vmem:[#allocation2] sm:$0xc]
  %v371 = vrot.slane %v369, 2
  %v373 = vadd.f32 %v365, %v371
  %v374 = vld [vmem:[#allocation2 + $0x18] sm:$0x30]
  %v376 = vrot.slane %v374, 4
  %v378 = vadd.f32 %v367, %v376
  %v379 = vxor.u32 %v373, 2147483648
  %v380 = vmul.f32 %v379, 1.442695
  %v381 = vpow.pop %v380
  %v382 = vadd.f32 %v381, 1.0
  %v383 = vrcp.pop %v382
  %v384 = vmul.f32 1.0, %v383
  %v385 = vtanh.pop %v373
  %v386 = vmul.f32 %v384, %v250
  %388 = vrot.lane.b32.xlu0 %v385, 32
  %v389 = vpop.permute.xlu0 %388
  %v391 = vmul.f32 %v384, %v389
  %393 = vrot.lane.b32.xlu0 %v391, 32
  %v394 = vpop.permute.xlu0 %393
  %v396 = vadd.f32 %v386, %v394
  %v397 = vtanh.pop %v396
  %399 = vrot.lane.b32.xlu0 %v397, 32
  %v400 = vpop.permute.xlu0 %399
  %v402 = vmul.f32 %v384, %v400
  %v403 = vxor.u32 %v378, 2147483648
  %v404 = vmul.f32 %v403, 1.442695
  %v405 = vpow.pop %v404
  %v406 = vadd.f32 %v405, 1.0
  %v407 = vrcp.pop %v406
  %v408 = vmul.f32 1.0, %v407
  %v409 = vtanh.pop %v378
  %v410 = vmul.f32 %v408, %v274
  %412 = vrot.lane.b32.xlu0 %v409, 32
  %v413 = vpop.permute.xlu0 %412
  %v415 = vmul.f32 %v408, %v413
  %417 = vrot.lane.b32.xlu0 %v415, 32
  %v418 = vpop.permute.xlu0 %417
  %v420 = vadd.f32 %v410, %v418
  %v421 = vtanh.pop %v420
  %423 = vrot.lane.b32.xlu0 %v421, 32
  %v424 = vpop.permute.xlu0 %423
  %v426 = vmul.f32 %v408, %v424
  %428 = vrot.lane.b32.xlu0 %v402, 64
  %v429 = vpop.permute.xlu0 %428
  %431 = vst.msk [vmem:[#allocation3 + $0x2] sm:$0x3] %vm285, %v429
  %433 = vrot.lane.b32.xlu0 %v426, 96
  %v434 = vpop.permute.xlu0 %433
  %436 = vst.msk [vmem:[#allocation3 + $0xc] sm:$0x3] %vm291, %v434
  %v437 = vsel %vm293, %v429, %v434
  %v439 = vsel %vm151, %v437, 0
  %441 = vmatprep.subr.mxu0 0.0
  %442 = vmatpush1.msra.mxu0 0.0
  %443 = vmatprep.subr.mxu0 0.0
  %444 = vmatpush1.msra.mxu0 0.0
  %445 = vmatprep.subr.mxu0 0.0
  %446 = vmatpush1.msra.mxu0 0.0
  %447 = vmatprep.subr.mxu0 0.0
  %448 = vmatpush1.msra.mxu0 0.0
  %449 = vmatprep.subr.mxu0 0.0
  %450 = vmatpush1.msra.mxu0 0.0
  %451 = vmatprep.subr.mxu0 0.0
  %452 = vmatpush1.msra.mxu0 0.0
  %453 = vmatprep.subr.mxu0 0.0
  %454 = vmatpush1.msra.mxu0 0.0
  %455 = vmatprep.subr.mxu0 0.0
  %456 = vmatpush1.msra.mxu0 0.0
  %457 = vmatprep.subr.mxu0 %v150
  %458 = vmatpush1.msra.mxu0 %v149
  %459 = vmatprep.subr.mxu0 %v148
  %460 = vmatpush1.msra.mxu0 %v147
  %461 = vmatprep.subr.mxu0 %v146
  %462 = vmatpush1.msra.mxu0 %v145
  %463 = vmatprep.subr.mxu0 %v144
  %464 = vmatpush1.msra.mxu0 %v143
  %465 = vmatprep.subr.mxu0 %v142
  %466 = vmatpush1.msra.mxu0 %v141
  %467 = vmatprep.subr.mxu0 %v140
  %468 = vmatpush1.msra.mxu0 %v139
  %469 = vmatprep.subr.mxu0 %v138
  %470 = vmatpush1.msra.mxu0 %v137
  %471 = vmatprep.subr.mxu0 %v136
  %472 = vmatpush1.msra.mxu0 %v135
  %473 = vmatprep.subr.mxu0 0.0
  %474 = vmatpush2.msra.mxu0 0.0
  %475 = vmatprep.subr.mxu0 0.0
  %476 = vmatpush2.msra.mxu0 0.0
  %477 = vmatprep.subr.mxu0 0.0
  %478 = vmatpush2.msra.mxu0 0.0
  %479 = vmatprep.subr.mxu0 0.0
  %480 = vmatpush2.msra.mxu0 0.0
  %481 = vmatprep.subr.mxu0 0.0
  %482 = vmatpush2.msra.mxu0 0.0
  %483 = vmatprep.subr.mxu0 0.0
  %484 = vmatpush2.msra.mxu0 0.0
  %485 = vmatprep.subr.mxu0 0.0
  %486 = vmatpush2.msra.mxu0 0.0
  %487 = vmatprep.subr.mxu0 0.0
  %488 = vmatpush2.msra.mxu0 0.0
  %489 = vmatprep.subr.mxu0 0.0
  %490 = vmatpush2.msra.mxu0 0.0
  %491 = vmatprep.subr.mxu0 0.0
  %492 = vmatpush2.msra.mxu0 0.0
  %493 = vmatprep.subr.mxu0 0.0
  %494 = vmatpush2.msra.mxu0 0.0
  %495 = vmatprep.subr.mxu0 0.0
  %496 = vmatpush2.msra.mxu0 0.0
  %497 = vmatprep.subr.mxu0 0.0
  %498 = vmatpush2.msra.mxu0 0.0
  %499 = vmatprep.subr.mxu0 0.0
  %500 = vmatpush2.msra.mxu0 0.0
  %501 = vmatprep.subr.mxu0 0.0
  %502 = vmatpush2.msra.mxu0 0.0
  %503 = vmatprep.subr.mxu0 0.0
  %504 = vmatpush2.msra.mxu0 0.0
  %505 = vmatprep.mubr.f32.mxu0 0.0
  %506 = vmatmul.mubr.f32.gmra.mxu0 %v439
  %v507 = vpop.f32.mrf.mxu0
  %v508 = vadd.f32 0.0, %v507
  %v509 = vpop.f32.mrf.mxu0
  %v510 = vadd.f32 0.0, %v509
  %511 = vdwg.mxu0
  %v512 = vld [vmem:[#allocation2] sm:$0x30]
  %v514 = vrot.slane %v512, 4
  %v516 = vadd.f32 %v508, %v514
  %v517 = vld [vmem:[#allocation2 + $0x18] sm:$0xc]
  %v519 = vrot.slane %v517, 2
  %v521 = vadd.f32 %v510, %v519
  %v522 = vxor.u32 %v516, 2147483648
  %v523 = vmul.f32 %v522, 1.442695
  %v524 = vpow.pop %v523
  %v525 = vadd.f32 %v524, 1.0
  %v526 = vrcp.pop %v525
  %v527 = vmul.f32 1.0, %v526
  %v528 = vtanh.pop %v516
  %v529 = vmul.f32 %v527, %v396
  %531 = vrot.lane.b32.xlu0 %v528, 32
  %v532 = vpop.permute.xlu0 %531
  %v534 = vmul.f32 %v527, %v532
  %536 = vrot.lane.b32.xlu0 %v534, 32
  %v537 = vpop.permute.xlu0 %536
  %v539 = vadd.f32 %v529, %v537
  %v540 = vtanh.pop %v539
  %542 = vrot.lane.b32.xlu0 %v540, 32
  %v543 = vpop.permute.xlu0 %542
  %v545 = vmul.f32 %v527, %v543
  %v546 = vxor.u32 %v521, 2147483648
  %v547 = vmul.f32 %v546, 1.442695
  %v548 = vpow.pop %v547
  %v549 = vadd.f32 %v548, 1.0
  %v550 = vrcp.pop %v549
  %v551 = vmul.f32 1.0, %v550
  %v552 = vtanh.pop %v521
  %v553 = vmul.f32 %v551, %v420
  %555 = vrot.lane.b32.xlu0 %v552, 32
  %v556 = vpop.permute.xlu0 %555
  %v558 = vmul.f32 %v551, %v556
  %560 = vrot.lane.b32.xlu0 %v558, 32
  %v561 = vpop.permute.xlu0 %560
  %v563 = vadd.f32 %v553, %v561
  %v564 = vtanh.pop %v563
  %566 = vrot.lane.b32.xlu0 %v564, 32
  %v567 = vpop.permute.xlu0 %566
  %v569 = vmul.f32 %v551, %v567
  %571 = vrot.lane.b32.xlu0 %v545, 64
  %v572 = vpop.permute.xlu0 %571
  %574 = vst.msk [vmem:[#allocation3 + $0x4] sm:$0x3] %vm285, %v572
  %576 = vrot.lane.b32.xlu0 %v569, 96
  %v577 = vpop.permute.xlu0 %576
  %579 = vst.msk [vmem:[#allocation3 + $0xa] sm:$0x3] %vm291, %v577
  %v580 = vsel %vm293, %v572, %v577
  %v582 = vsel %vm151, %v580, 0
  %584 = vmatprep.subr.mxu0 0.0
  %585 = vmatpush1.msra.mxu0 0.0
  %586 = vmatprep.subr.mxu0 0.0
  %587 = vmatpush1.msra.mxu0 0.0
  %588 = vmatprep.subr.mxu0 0.0
  %589 = vmatpush1.msra.mxu0 0.0
  %590 = vmatprep.subr.mxu0 0.0
  %591 = vmatpush1.msra.mxu0 0.0
  %592 = vmatprep.subr.mxu0 0.0
  %593 = vmatpush1.msra.mxu0 0.0
  %594 = vmatprep.subr.mxu0 0.0
  %595 = vmatpush1.msra.mxu0 0.0
  %596 = vmatprep.subr.mxu0 0.0
  %597 = vmatpush1.msra.mxu0 0.0
  %598 = vmatprep.subr.mxu0 0.0
  %599 = vmatpush1.msra.mxu0 0.0
  %600 = vmatprep.subr.mxu0 %v150
  %601 = vmatpush1.msra.mxu0 %v149
  %602 = vmatprep.subr.mxu0 %v148
  %603 = vmatpush1.msra.mxu0 %v147
  %604 = vmatprep.subr.mxu0 %v146
  %605 = vmatpush1.msra.mxu0 %v145
  %606 = vmatprep.subr.mxu0 %v144
  %607 = vmatpush1.msra.mxu0 %v143
  %608 = vmatprep.subr.mxu0 %v142
  %609 = vmatpush1.msra.mxu0 %v141
  %610 = vmatprep.subr.mxu0 %v140
  %611 = vmatpush1.msra.mxu0 %v139
  %612 = vmatprep.subr.mxu0 %v138
  %613 = vmatpush1.msra.mxu0 %v137
  %614 = vmatprep.subr.mxu0 %v136
  %615 = vmatpush1.msra.mxu0 %v135
  %616 = vmatprep.subr.mxu0 0.0
  %617 = vmatpush2.msra.mxu0 0.0
  %618 = vmatprep.subr.mxu0 0.0
  %619 = vmatpush2.msra.mxu0 0.0
  %620 = vmatprep.subr.mxu0 0.0
  %621 = vmatpush2.msra.mxu0 0.0
  %622 = vmatprep.subr.mxu0 0.0
  %623 = vmatpush2.msra.mxu0 0.0
  %624 = vmatprep.subr.mxu0 0.0
  %625 = vmatpush2.msra.mxu0 0.0
  %626 = vmatprep.subr.mxu0 0.0
  %627 = vmatpush2.msra.mxu0 0.0
  %628 = vmatprep.subr.mxu0 0.0
  %629 = vmatpush2.msra.mxu0 0.0
  %630 = vmatprep.subr.mxu0 0.0
  %631 = vmatpush2.msra.mxu0 0.0
  %632 = vmatprep.subr.mxu0 0.0
  %633 = vmatpush2.msra.mxu0 0.0
  %634 = vmatprep.subr.mxu0 0.0
  %635 = vmatpush2.msra.mxu0 0.0
  %636 = vmatprep.subr.mxu0 0.0
  %637 = vmatpush2.msra.mxu0 0.0
  %638 = vmatprep.subr.mxu0 0.0
  %639 = vmatpush2.msra.mxu0 0.0
  %640 = vmatprep.subr.mxu0 0.0
  %641 = vmatpush2.msra.mxu0 0.0
  %642 = vmatprep.subr.mxu0 0.0
  %643 = vmatpush2.msra.mxu0 0.0
  %644 = vmatprep.subr.mxu0 0.0
  %645 = vmatpush2.msra.mxu0 0.0
  %646 = vmatprep.subr.mxu0 0.0
  %647 = vmatpush2.msra.mxu0 0.0
  %648 = vmatprep.mubr.f32.mxu0 0.0
  %649 = vmatmul.mubr.f32.gmra.mxu0 %v582
  %v650 = vpop.f32.mrf.mxu0
  %v651 = vadd.f32 0.0, %v650
  %v652 = vpop.f32.mrf.mxu0
  %v653 = vadd.f32 0.0, %v652
  %654 = vdwg.mxu0
  %v655 = vld [vmem:[#allocation2] sm:$0xc0]
  %v657 = vrot.slane %v655, 6
  %v659 = vadd.f32 %v651, %v657
  %v660 = vld [vmem:[#allocation2 + $0x18] sm:$0x3]
  %v661 = vadd.f32 %v653, %v660
  %v662 = vxor.u32 %v659, 2147483648
  %v663 = vmul.f32 %v662, 1.442695
  %v664 = vpow.pop %v663
  %v665 = vadd.f32 %v664, 1.0
  %v666 = vrcp.pop %v665
  %v667 = vmul.f32 1.0, %v666
  %v668 = vtanh.pop %v659
  %v669 = vmul.f32 %v667, %v539
  %671 = vrot.lane.b32.xlu0 %v668, 32
  %v672 = vpop.permute.xlu0 %671
  %v674 = vmul.f32 %v667, %v672
  %676 = vrot.lane.b32.xlu0 %v674, 32
  %v677 = vpop.permute.xlu0 %676
  %v679 = vadd.f32 %v669, %v677
  %v680 = vtanh.pop %v679
  %682 = vrot.lane.b32.xlu0 %v680, 32
  %v683 = vpop.permute.xlu0 %682
  %v685 = vmul.f32 %v667, %v683
  %v686 = vxor.u32 %v661, 2147483648
  %v687 = vmul.f32 %v686, 1.442695
  %v688 = vpow.pop %v687
  %v689 = vadd.f32 %v688, 1.0
  %v690 = vrcp.pop %v689
  %v691 = vmul.f32 1.0, %v690
  %v692 = vtanh.pop %v661
  %v693 = vmul.f32 %v691, %v563
  %695 = vrot.lane.b32.xlu0 %v692, 32
  %v696 = vpop.permute.xlu0 %695
  %v698 = vmul.f32 %v691, %v696
  %700 = vrot.lane.b32.xlu0 %v698, 32
  %v701 = vpop.permute.xlu0 %700
  %v703 = vadd.f32 %v693, %v701
  %v704 = vtanh.pop %v703
  %706 = vrot.lane.b32.xlu0 %v704, 32
  %v707 = vpop.permute.xlu0 %706
  %v709 = vmul.f32 %v691, %v707
  %711 = vrot.lane.b32.xlu0 %v685, 64
  %v712 = vpop.permute.xlu0 %711
  %714 = vst.msk [vmem:[#allocation3 + $0x6] sm:$0x3] %vm285, %v712
  %716 = vrot.lane.b32.xlu0 %v709, 96
  %v717 = vpop.permute.xlu0 %716
  %719 = vst.msk [vmem:[#allocation3 + $0x8] sm:$0x3] %vm291, %v717
  %v720 = vsel %vm293, %v712, %v717
  %v722 = vsel %vm151, %v720, 0
  %724 = vmatprep.subr.mxu0 0.0
  %725 = vmatpush1.msra.mxu0 0.0
  %726 = vmatprep.subr.mxu0 0.0
  %727 = vmatpush1.msra.mxu0 0.0
  %728 = vmatprep.subr.mxu0 0.0
  %729 = vmatpush1.msra.mxu0 0.0
  %730 = vmatprep.subr.mxu0 0.0
  %731 = vmatpush1.msra.mxu0 0.0
  %732 = vmatprep.subr.mxu0 0.0
  %733 = vmatpush1.msra.mxu0 0.0
  %734 = vmatprep.subr.mxu0 0.0
  %735 = vmatpush1.msra.mxu0 0.0
  %736 = vmatprep.subr.mxu0 0.0
  %737 = vmatpush1.msra.mxu0 0.0
  %738 = vmatprep.subr.mxu0 0.0
  %739 = vmatpush1.msra.mxu0 0.0
  %740 = vmatprep.subr.mxu0 %v150
  %741 = vmatpush1.msra.mxu0 %v149
  %742 = vmatprep.subr.mxu0 %v148
  %743 = vmatpush1.msra.mxu0 %v147
  %744 = vmatprep.subr.mxu0 %v146
  %745 = vmatpush1.msra.mxu0 %v145
  %746 = vmatprep.subr.mxu0 %v144
  %747 = vmatpush1.msra.mxu0 %v143
  %748 = vmatprep.subr.mxu0 %v142
  %749 = vmatpush1.msra.mxu0 %v141
  %750 = vmatprep.subr.mxu0 %v140
  %751 = vmatpush1.msra.mxu0 %v139
  %752 = vmatprep.subr.mxu0 %v138
  %753 = vmatpush1.msra.mxu0 %v137
  %754 = vmatprep.subr.mxu0 %v136
  %755 = vmatpush1.msra.mxu0 %v135
  %756 = vmatprep.subr.mxu0 0.0
  %757 = vmatpush2.msra.mxu0 0.0
  %758 = vmatprep.subr.mxu0 0.0
  %759 = vmatpush2.msra.mxu0 0.0
  %760 = vmatprep.subr.mxu0 0.0
  %761 = vmatpush2.msra.mxu0 0.0
  %762 = vmatprep.subr.mxu0 0.0
  %763 = vmatpush2.msra.mxu0 0.0
  %764 = vmatprep.subr.mxu0 0.0
  %765 = vmatpush2.msra.mxu0 0.0
  %766 = vmatprep.subr.mxu0 0.0
  %767 = vmatpush2.msra.mxu0 0.0
  %768 = vmatprep.subr.mxu0 0.0
  %769 = vmatpush2.msra.mxu0 0.0
  %770 = vmatprep.subr.mxu0 0.0
  %771 = vmatpush2.msra.mxu0 0.0
  %772 = vmatprep.subr.mxu0 0.0
  %773 = vmatpush2.msra.mxu0 0.0
  %774 = vmatprep.subr.mxu0 0.0
  %775 = vmatpush2.msra.mxu0 0.0
  %776 = vmatprep.subr.mxu0 0.0
  %777 = vmatpush2.msra.mxu0 0.0
  %778 = vmatprep.subr.mxu0 0.0
  %779 = vmatpush2.msra.mxu0 0.0
  %780 = vmatprep.subr.mxu0 0.0
  %781 = vmatpush2.msra.mxu0 0.0
  %782 = vmatprep.subr.mxu0 0.0
  %783 = vmatpush2.msra.mxu0 0.0
  %784 = vmatprep.subr.mxu0 0.0
  %785 = vmatpush2.msra.mxu0 0.0
  %786 = vmatprep.subr.mxu0 0.0
  %787 = vmatpush2.msra.mxu0 0.0
  %788 = vmatprep.mubr.f32.mxu0 0.0
  %789 = vmatmul.mubr.f32.gmra.mxu0 %v722
  %v790 = vpop.f32.mrf.mxu0
  %v791 = vadd.f32 0.0, %v790
  %v792 = vpop.f32.mrf.mxu0
  %v793 = vadd.f32 0.0, %v792
  %794 = vdwg.mxu0
  %v795 = vld [vmem:[#allocation2 + $0x10] sm:$0x3]
  %v796 = vadd.f32 %v791, %v795
  %v797 = vld [vmem:[#allocation2 + $0x8] sm:$0xc0]
  %v799 = vrot.slane %v797, 6
  %v801 = vadd.f32 %v793, %v799
  %v802 = vxor.u32 %v796, 2147483648
  %v803 = vmul.f32 %v802, 1.442695
  %v804 = vpow.pop %v803
  %v805 = vadd.f32 %v804, 1.0
  %v806 = vrcp.pop %v805
  %v807 = vmul.f32 1.0, %v806
  %v808 = vtanh.pop %v796
  %v809 = vmul.f32 %v807, %v679
  %811 = vrot.lane.b32.xlu0 %v808, 32
  %v812 = vpop.permute.xlu0 %811
  %v814 = vmul.f32 %v807, %v812
  %816 = vrot.lane.b32.xlu0 %v814, 32
  %v817 = vpop.permute.xlu0 %816
  %v819 = vadd.f32 %v809, %v817
  %v820 = vtanh.pop %v819
  %822 = vrot.lane.b32.xlu0 %v820, 32
  %v823 = vpop.permute.xlu0 %822
  %v825 = vmul.f32 %v807, %v823
  %v826 = vxor.u32 %v801, 2147483648
  %v827 = vmul.f32 %v826, 1.442695
  %v828 = vpow.pop %v827
  %v829 = vadd.f32 %v828, 1.0
  %v830 = vrcp.pop %v829
  %v831 = vmul.f32 1.0, %v830
  %v832 = vtanh.pop %v801
  %v833 = vmul.f32 %v831, %v703
  %835 = vrot.lane.b32.xlu0 %v832, 32
  %v836 = vpop.permute.xlu0 %835
  %v838 = vmul.f32 %v831, %v836
  %840 = vrot.lane.b32.xlu0 %v838, 32
  %v841 = vpop.permute.xlu0 %840
  %v843 = vadd.f32 %v833, %v841
  %v844 = vtanh.pop %v843
  %846 = vrot.lane.b32.xlu0 %v844, 32
  %v847 = vpop.permute.xlu0 %846
  %v849 = vmul.f32 %v831, %v847
  %851 = vrot.lane.b32.xlu0 %v825, 64
  %v852 = vpop.permute.xlu0 %851
  %854 = vst.msk [vmem:[#allocation3 + $0x8] sm:$0x3] %vm285, %v852
  %856 = vrot.lane.b32.xlu0 %v849, 96
  %v857 = vpop.permute.xlu0 %856
  %859 = vst.msk [vmem:[#allocation3 + $0x6] sm:$0x3] %vm291, %v857
  %v860 = vsel %vm293, %v852, %v857
  %v862 = vsel %vm151, %v860, 0
  %864 = vmatprep.subr.mxu0 0.0
  %865 = vmatpush1.msra.mxu0 0.0
  %866 = vmatprep.subr.mxu0 0.0
  %867 = vmatpush1.msra.mxu0 0.0
  %868 = vmatprep.subr.mxu0 0.0
  %869 = vmatpush1.msra.mxu0 0.0
  %870 = vmatprep.subr.mxu0 0.0
  %871 = vmatpush1.msra.mxu0 0.0
  %872 = vmatprep.subr.mxu0 0.0
  %873 = vmatpush1.msra.mxu0 0.0
  %874 = vmatprep.subr.mxu0 0.0
  %875 = vmatpush1.msra.mxu0 0.0
  %876 = vmatprep.subr.mxu0 0.0
  %877 = vmatpush1.msra.mxu0 0.0
  %878 = vmatprep.subr.mxu0 0.0
  %879 = vmatpush1.msra.mxu0 0.0
  %880 = vmatprep.subr.mxu0 %v150
  %881 = vmatpush1.msra.mxu0 %v149
  %882 = vmatprep.subr.mxu0 %v148
  %883 = vmatpush1.msra.mxu0 %v147
  %884 = vmatprep.subr.mxu0 %v146
  %885 = vmatpush1.msra.mxu0 %v145
  %886 = vmatprep.subr.mxu0 %v144
  %887 = vmatpush1.msra.mxu0 %v143
  %888 = vmatprep.subr.mxu0 %v142
  %889 = vmatpush1.msra.mxu0 %v141
  %890 = vmatprep.subr.mxu0 %v140
  %891 = vmatpush1.msra.mxu0 %v139
  %892 = vmatprep.subr.mxu0 %v138
  %893 = vmatpush1.msra.mxu0 %v137
  %894 = vmatprep.subr.mxu0 %v136
  %895 = vmatpush1.msra.mxu0 %v135
  %896 = vmatprep.subr.mxu0 0.0
  %897 = vmatpush2.msra.mxu0 0.0
  %898 = vmatprep.subr.mxu0 0.0
  %899 = vmatpush2.msra.mxu0 0.0
  %900 = vmatprep.subr.mxu0 0.0
  %901 = vmatpush2.msra.mxu0 0.0
  %902 = vmatprep.subr.mxu0 0.0
  %903 = vmatpush2.msra.mxu0 0.0
  %904 = vmatprep.subr.mxu0 0.0
  %905 = vmatpush2.msra.mxu0 0.0
  %906 = vmatprep.subr.mxu0 0.0
  %907 = vmatpush2.msra.mxu0 0.0
  %908 = vmatprep.subr.mxu0 0.0
  %909 = vmatpush2.msra.mxu0 0.0
  %910 = vmatprep.subr.mxu0 0.0
  %911 = vmatpush2.msra.mxu0 0.0
  %912 = vmatprep.subr.mxu0 0.0
  %913 = vmatpush2.msra.mxu0 0.0
  %914 = vmatprep.subr.mxu0 0.0
  %915 = vmatpush2.msra.mxu0 0.0
  %916 = vmatprep.subr.mxu0 0.0
  %917 = vmatpush2.msra.mxu0 0.0
  %918 = vmatprep.subr.mxu0 0.0
  %919 = vmatpush2.msra.mxu0 0.0
  %920 = vmatprep.subr.mxu0 0.0
  %921 = vmatpush2.msra.mxu0 0.0
  %922 = vmatprep.subr.mxu0 0.0
  %923 = vmatpush2.msra.mxu0 0.0
  %924 = vmatprep.subr.mxu0 0.0
  %925 = vmatpush2.msra.mxu0 0.0
  %926 = vmatprep.subr.mxu0 0.0
  %927 = vmatpush2.msra.mxu0 0.0
  %928 = vmatprep.mubr.f32.mxu0 0.0
  %929 = vmatmul.mubr.f32.gmra.mxu0 %v862
  %v930 = vpop.f32.mrf.mxu0
  %v931 = vadd.f32 0.0, %v930
  %v932 = vpop.f32.mrf.mxu0
  %v933 = vadd.f32 0.0, %v932
  %934 = vdwg.mxu0
  %v935 = vld [vmem:[#allocation2 + $0x10] sm:$0xc]
  %v937 = vrot.slane %v935, 2
  %v939 = vadd.f32 %v931, %v937
  %v940 = vld [vmem:[#allocation2 + $0x8] sm:$0x30]
  %v942 = vrot.slane %v940, 4
  %v944 = vadd.f32 %v933, %v942
  %v945 = vxor.u32 %v939, 2147483648
  %v946 = vmul.f32 %v945, 1.442695
  %v947 = vpow.pop %v946
  %v948 = vadd.f32 %v947, 1.0
  %v949 = vrcp.pop %v948
  %v950 = vmul.f32 1.0, %v949
  %v951 = vtanh.pop %v939
  %v952 = vmul.f32 %v950, %v819
  %954 = vrot.lane.b32.xlu0 %v951, 32
  %v955 = vpop.permute.xlu0 %954
  %v957 = vmul.f32 %v950, %v955
  %959 = vrot.lane.b32.xlu0 %v957, 32
  %v960 = vpop.permute.xlu0 %959
  %v962 = vadd.f32 %v952, %v960
  %v963 = vtanh.pop %v962
  %965 = vrot.lane.b32.xlu0 %v963, 32
  %v966 = vpop.permute.xlu0 %965
  %v968 = vmul.f32 %v950, %v966
  %v969 = vxor.u32 %v944, 2147483648
  %v970 = vmul.f32 %v969, 1.442695
  %v971 = vpow.pop %v970
  %v972 = vadd.f32 %v971, 1.0
  %v973 = vrcp.pop %v972
  %v974 = vmul.f32 1.0, %v973
  %v975 = vtanh.pop %v944
  %v976 = vmul.f32 %v974, %v843
  %978 = vrot.lane.b32.xlu0 %v975, 32
  %v979 = vpop.permute.xlu0 %978
  %v981 = vmul.f32 %v974, %v979
  %983 = vrot.lane.b32.xlu0 %v981, 32
  %v984 = vpop.permute.xlu0 %983
  %v986 = vadd.f32 %v976, %v984
  %v987 = vtanh.pop %v986
  %989 = vrot.lane.b32.xlu0 %v987, 32
  %v990 = vpop.permute.xlu0 %989
  %v992 = vmul.f32 %v974, %v990
  %994 = vrot.lane.b32.xlu0 %v968, 64
  %v995 = vpop.permute.xlu0 %994
  %997 = vst.msk [vmem:[#allocation3 + $0xa] sm:$0x3] %vm285, %v995
  %999 = vrot.lane.b32.xlu0 %v992, 96
  %v1000 = vpop.permute.xlu0 %999
  %1002 = vst.msk [vmem:[#allocation3 + $0x4] sm:$0x3] %vm291, %v1000
  %v1003 = vsel %vm293, %v995, %v1000
  %v1005 = vsel %vm151, %v1003, 0
  %1007 = vmatprep.subr.mxu0 0.0
  %1008 = vmatpush1.msra.mxu0 0.0
  %1009 = vmatprep.subr.mxu0 0.0
  %1010 = vmatpush1.msra.mxu0 0.0
  %1011 = vmatprep.subr.mxu0 0.0
  %1012 = vmatpush1.msra.mxu0 0.0
  %1013 = vmatprep.subr.mxu0 0.0
  %1014 = vmatpush1.msra.mxu0 0.0
  %1015 = vmatprep.subr.mxu0 0.0
  %1016 = vmatpush1.msra.mxu0 0.0
  %1017 = vmatprep.subr.mxu0 0.0
  %1018 = vmatpush1.msra.mxu0 0.0
  %1019 = vmatprep.subr.mxu0 0.0
  %1020 = vmatpush1.msra.mxu0 0.0
  %1021 = vmatprep.subr.mxu0 0.0
  %1022 = vmatpush1.msra.mxu0 0.0
  %1023 = vmatprep.subr.mxu0 %v150
  %1024 = vmatpush1.msra.mxu0 %v149
  %1025 = vmatprep.subr.mxu0 %v148
  %1026 = vmatpush1.msra.mxu0 %v147
  %1027 = vmatprep.subr.mxu0 %v146
  %1028 = vmatpush1.msra.mxu0 %v145
  %1029 = vmatprep.subr.mxu0 %v144
  %1030 = vmatpush1.msra.mxu0 %v143
  %1031 = vmatprep.subr.mxu0 %v142
  %1032 = vmatpush1.msra.mxu0 %v141
  %1033 = vmatprep.subr.mxu0 %v140
  %1034 = vmatpush1.msra.mxu0 %v139
  %1035 = vmatprep.subr.mxu0 %v138
  %1036 = vmatpush1.msra.mxu0 %v137
  %1037 = vmatprep.subr.mxu0 %v136
  %1038 = vmatpush1.msra.mxu0 %v135
  %1039 = vmatprep.subr.mxu0 0.0
  %1040 = vmatpush2.msra.mxu0 0.0
  %1041 = vmatprep.subr.mxu0 0.0
  %1042 = vmatpush2.msra.mxu0 0.0
  %1043 = vmatprep.subr.mxu0 0.0
  %1044 = vmatpush2.msra.mxu0 0.0
  %1045 = vmatprep.subr.mxu0 0.0
  %1046 = vmatpush2.msra.mxu0 0.0
  %1047 = vmatprep.subr.mxu0 0.0
  %1048 = vmatpush2.msra.mxu0 0.0
  %1049 = vmatprep.subr.mxu0 0.0
  %1050 = vmatpush2.msra.mxu0 0.0
  %1051 = vmatprep.subr.mxu0 0.0
  %1052 = vmatpush2.msra.mxu0 0.0
  %1053 = vmatprep.subr.mxu0 0.0
  %1054 = vmatpush2.msra.mxu0 0.0
  %1055 = vmatprep.subr.mxu0 0.0
  %1056 = vmatpush2.msra.mxu0 0.0
  %1057 = vmatprep.subr.mxu0 0.0
  %1058 = vmatpush2.msra.mxu0 0.0
  %1059 = vmatprep.subr.mxu0 0.0
  %1060 = vmatpush2.msra.mxu0 0.0
  %1061 = vmatprep.subr.mxu0 0.0
  %1062 = vmatpush2.msra.mxu0 0.0
  %1063 = vmatprep.subr.mxu0 0.0
  %1064 = vmatpush2.msra.mxu0 0.0
  %1065 = vmatprep.subr.mxu0 0.0
  %1066 = vmatpush2.msra.mxu0 0.0
  %1067 = vmatprep.subr.mxu0 0.0
  %1068 = vmatpush2.msra.mxu0 0.0
  %1069 = vmatprep.subr.mxu0 0.0
  %1070 = vmatpush2.msra.mxu0 0.0
  %1071 = vmatprep.mubr.f32.mxu0 0.0
  %1072 = vmatmul.mubr.f32.gmra.mxu0 %v1005
  %v1073 = vpop.f32.mrf.mxu0
  %v1074 = vadd.f32 0.0, %v1073
  %v1075 = vpop.f32.mrf.mxu0
  %v1076 = vadd.f32 0.0, %v1075
  %1077 = vdwg.mxu0
  %v1078 = vld [vmem:[#allocation2 + $0x10] sm:$0x30]
  %v1080 = vrot.slane %v1078, 4
  %v1082 = vadd.f32 %v1074, %v1080
  %v1083 = vld [vmem:[#allocation2 + $0x8] sm:$0xc]
  %v1085 = vrot.slane %v1083, 2
  %v1087 = vadd.f32 %v1076, %v1085
  %v1088 = vxor.u32 %v1082, 2147483648
  %v1089 = vmul.f32 %v1088, 1.442695
  %v1090 = vpow.pop %v1089
  %v1091 = vadd.f32 %v1090, 1.0
  %v1092 = vrcp.pop %v1091
  %v1093 = vmul.f32 1.0, %v1092
  %v1094 = vtanh.pop %v1082
  %v1095 = vmul.f32 %v1093, %v962
  %1097 = vrot.lane.b32.xlu0 %v1094, 32
  %v1098 = vpop.permute.xlu0 %1097
  %v1100 = vmul.f32 %v1093, %v1098
  %1102 = vrot.lane.b32.xlu0 %v1100, 32
  %v1103 = vpop.permute.xlu0 %1102
  %v1105 = vadd.f32 %v1095, %v1103
  %v1106 = vtanh.pop %v1105
  %1108 = vrot.lane.b32.xlu0 %v1106, 32
  %v1109 = vpop.permute.xlu0 %1108
  %v1111 = vmul.f32 %v1093, %v1109
  %v1112 = vxor.u32 %v1087, 2147483648
  %v1113 = vmul.f32 %v1112, 1.442695
  %v1114 = vpow.pop %v1113
  %v1115 = vadd.f32 %v1114, 1.0
  %v1116 = vrcp.pop %v1115
  %v1117 = vmul.f32 1.0, %v1116
  %v1118 = vtanh.pop %v1087
  %v1119 = vmul.f32 %v1117, %v986
  %1121 = vrot.lane.b32.xlu0 %v1118, 32
  %v1122 = vpop.permute.xlu0 %1121
  %v1124 = vmul.f32 %v1117, %v1122
  %1126 = vrot.lane.b32.xlu0 %v1124, 32
  %v1127 = vpop.permute.xlu0 %1126
  %v1129 = vadd.f32 %v1119, %v1127
  %v1130 = vtanh.pop %v1129
  %1132 = vrot.lane.b32.xlu0 %v1130, 32
  %v1133 = vpop.permute.xlu0 %1132
  %v1135 = vmul.f32 %v1117, %v1133
  %1137 = vrot.lane.b32.xlu0 %v1111, 64
  %v1138 = vpop.permute.xlu0 %1137
  %1140 = vst.msk [vmem:[#allocation3 + $0xc] sm:$0x3] %vm285, %v1138
  %1142 = vrot.lane.b32.xlu0 %v1135, 96
  %v1143 = vpop.permute.xlu0 %1142
  %1145 = vst.msk [vmem:[#allocation3 + $0x2] sm:$0x3] %vm291, %v1143
  %v1146 = vsel %vm293, %v1138, %v1143
  %v1148 = vsel %vm151, %v1146, 0
  %1150 = vmatprep.subr.mxu0 0.0
  %1151 = vmatpush1.msra.mxu0 0.0
  %1152 = vmatprep.subr.mxu0 0.0
  %1153 = vmatpush1.msra.mxu0 0.0
  %1154 = vmatprep.subr.mxu0 0.0
  %1155 = vmatpush1.msra.mxu0 0.0
  %1156 = vmatprep.subr.mxu0 0.0
  %1157 = vmatpush1.msra.mxu0 0.0
  %1158 = vmatprep.subr.mxu0 0.0
  %1159 = vmatpush1.msra.mxu0 0.0
  %1160 = vmatprep.subr.mxu0 0.0
  %1161 = vmatpush1.msra.mxu0 0.0
  %1162 = vmatprep.subr.mxu0 0.0
  %1163 = vmatpush1.msra.mxu0 0.0
  %1164 = vmatprep.subr.mxu0 0.0
  %1165 = vmatpush1.msra.mxu0 0.0
  %1166 = vmatprep.subr.mxu0 %v150
  %1167 = vmatpush1.msra.mxu0 %v149
  %1168 = vmatprep.subr.mxu0 %v148
  %1169 = vmatpush1.msra.mxu0 %v147
  %1170 = vmatprep.subr.mxu0 %v146
  %1171 = vmatpush1.msra.mxu0 %v145
  %1172 = vmatprep.subr.mxu0 %v144
  %1173 = vmatpush1.msra.mxu0 %v143
  %1174 = vmatprep.subr.mxu0 %v142
  %1175 = vmatpush1.msra.mxu0 %v141
  %1176 = vmatprep.subr.mxu0 %v140
  %1177 = vmatpush1.msra.mxu0 %v139
  %1178 = vmatprep.subr.mxu0 %v138
  %1179 = vmatpush1.msra.mxu0 %v137
  %1180 = vmatprep.subr.mxu0 %v136
  %1181 = vmatpush1.msra.mxu0 %v135
  %1182 = vmatprep.subr.mxu0 0.0
  %1183 = vmatpush2.msra.mxu0 0.0
  %1184 = vmatprep.subr.mxu0 0.0
  %1185 = vmatpush2.msra.mxu0 0.0
  %1186 = vmatprep.subr.mxu0 0.0
  %1187 = vmatpush2.msra.mxu0 0.0
  %1188 = vmatprep.subr.mxu0 0.0
  %1189 = vmatpush2.msra.mxu0 0.0
  %1190 = vmatprep.subr.mxu0 0.0
  %1191 = vmatpush2.msra.mxu0 0.0
  %1192 = vmatprep.subr.mxu0 0.0
  %1193 = vmatpush2.msra.mxu0 0.0
  %1194 = vmatprep.subr.mxu0 0.0
  %1195 = vmatpush2.msra.mxu0 0.0
  %1196 = vmatprep.subr.mxu0 0.0
  %1197 = vmatpush2.msra.mxu0 0.0
  %1198 = vmatprep.subr.mxu0 0.0
  %1199 = vmatpush2.msra.mxu0 0.0
  %1200 = vmatprep.subr.mxu0 0.0
  %1201 = vmatpush2.msra.mxu0 0.0
  %1202 = vmatprep.subr.mxu0 0.0
  %1203 = vmatpush2.msra.mxu0 0.0
  %1204 = vmatprep.subr.mxu0 0.0
  %1205 = vmatpush2.msra.mxu0 0.0
  %1206 = vmatprep.subr.mxu0 0.0
  %1207 = vmatpush2.msra.mxu0 0.0
  %1208 = vmatprep.subr.mxu0 0.0
  %1209 = vmatpush2.msra.mxu0 0.0
  %1210 = vmatprep.subr.mxu0 0.0
  %1211 = vmatpush2.msra.mxu0 0.0
  %1212 = vmatprep.subr.mxu0 0.0
  %1213 = vmatpush2.msra.mxu0 0.0
  %1214 = vmatprep.mubr.f32.mxu0 0.0
  %1215 = vmatmul.mubr.f32.gmra.mxu0 %v1148
  %v1216 = vpop.f32.mrf.mxu0
  %v1217 = vadd.f32 0.0, %v1216
  %v1218 = vpop.f32.mrf.mxu0
  %v1219 = vadd.f32 0.0, %v1218
  %1220 = vdwg.mxu0
  %v1221 = vld [vmem:[#allocation2 + $0x10] sm:$0xc0]
  %v1223 = vrot.slane %v1221, 6
  %v1225 = vadd.f32 %v1217, %v1223
  %v1226 = vld [vmem:[#allocation2 + $0x8] sm:$0x3]
  %v1227 = vadd.f32 %v1219, %v1226
  %v1228 = vxor.u32 %v1225, 2147483648
  %v1229 = vmul.f32 %v1228, 1.442695
  %v1230 = vpow.pop %v1229
  %v1231 = vadd.f32 %v1230, 1.0
  %v1232 = vrcp.pop %v1231
  %v1233 = vmul.f32 1.0, %v1232
  %v1234 = vtanh.pop %v1225
  %v1235 = vmul.f32 %v1233, %v1105
  %1237 = vrot.lane.b32.xlu0 %v1234, 32
  %v1238 = vpop.permute.xlu0 %1237
  %v1240 = vmul.f32 %v1233, %v1238
  %1242 = vrot.lane.b32.xlu0 %v1240, 32
  %v1243 = vpop.permute.xlu0 %1242
  %v1245 = vadd.f32 %v1235, %v1243
  %v1246 = vtanh.pop %v1245
  %1248 = vrot.lane.b32.xlu0 %v1246, 32
  %v1249 = vpop.permute.xlu0 %1248
  %v1251 = vmul.f32 %v1233, %v1249
  %v1252 = vxor.u32 %v1227, 2147483648
  %v1253 = vmul.f32 %v1252, 1.442695
  %v1254 = vpow.pop %v1253
  %v1255 = vadd.f32 %v1254, 1.0
  %v1256 = vrcp.pop %v1255
  %v1257 = vmul.f32 1.0, %v1256
  %v1258 = vtanh.pop %v1227
  %v1259 = vmul.f32 %v1257, %v1129
  %1261 = vrot.lane.b32.xlu0 %v1258, 32
  %v1262 = vpop.permute.xlu0 %1261
  %v1264 = vmul.f32 %v1257, %v1262
  %1266 = vrot.lane.b32.xlu0 %v1264, 32
  %v1267 = vpop.permute.xlu0 %1266
  %v1269 = vadd.f32 %v1259, %v1267
  %v1270 = vtanh.pop %v1269
  %1272 = vrot.lane.b32.xlu0 %v1270, 32
  %v1273 = vpop.permute.xlu0 %1272
  %v1275 = vmul.f32 %v1257, %v1273
  %1277 = vrot.lane.b32.xlu0 %v1251, 64
  %v1278 = vpop.permute.xlu0 %1277
  %1280 = vst.msk [vmem:[#allocation3 + $0xe] sm:$0x3] %vm285, %v1278
  %1282 = vrot.lane.b32.xlu0 %v1275, 96
  %v1283 = vpop.permute.xlu0 %1282
  %1285 = vst.msk [vmem:[#allocation3] sm:$0x3] %vm291, %v1283
  %v1286 = vld [vmem:[#allocation3] sm:$0xff]
  %v1287 = vld [vmem:[#allocation3 + $0x8] sm:$0xff]
  %v1288 = vld [vmem:[%s4] sm:$0xff]
  %v1289 = vld [vmem:[%s4 + $0x8] sm:$0xff]
  %v1290 = vld [vmem:[%s4 + $0x10] sm:$0xff]
  %v1291 = vld [vmem:[%s4 + $0x18] sm:$0xff]
  %v1292 = vld [vmem:[%s4 + $0x20] sm:$0xff]
  %v1293 = vld [vmem:[%s4 + $0x28] sm:$0xff]
  %v1294 = vld [vmem:[%s4 + $0x30] sm:$0xff]
  %v1295 = vld [vmem:[%s4 + $0x38] sm:$0xff]
  %v1296 = vld [vmem:[%s5] sm:$0x1]
  %v1298 = vlaneseq
  %v1299 = vshrl.u32 %v1298, 7
  %v1300 = vsub.s32 0, %v1299
  %v1301 = vrot.slane %v1296, %v1300
  %v1304 = vsel %vm151, %v1286, 0
  %v1307 = vsel %vm151, %v1287, 0
  %1309 = vmatprep.subr.mxu0 0.0
  %1310 = vmatpush1.msra.mxu0 0.0
  %1311 = vmatprep.subr.mxu0 0.0
  %1312 = vmatpush1.msra.mxu0 0.0
  %1313 = vmatprep.subr.mxu0 0.0
  %1314 = vmatpush1.msra.mxu0 0.0
  %1315 = vmatprep.subr.mxu0 0.0
  %1316 = vmatpush1.msra.mxu0 0.0
  %1317 = vmatprep.subr.mxu0 0.0
  %1318 = vmatpush1.msra.mxu0 0.0
  %1319 = vmatprep.subr.mxu0 0.0
  %1320 = vmatpush1.msra.mxu0 0.0
  %1321 = vmatprep.subr.mxu0 0.0
  %1322 = vmatpush1.msra.mxu0 0.0
  %1323 = vmatprep.subr.mxu0 0.0
  %1324 = vmatpush1.msra.mxu0 0.0
  %1325 = vmatprep.subr.mxu0 0.0
  %1326 = vmatpush1.msra.mxu0 %v1295
  %1327 = vmatprep.subr.mxu0 0.0
  %1328 = vmatpush1.msra.mxu0 %v1294
  %1329 = vmatprep.subr.mxu0 0.0
  %1330 = vmatpush1.msra.mxu0 %v1293
  %1331 = vmatprep.subr.mxu0 0.0
  %1332 = vmatpush1.msra.mxu0 %v1292
  %1333 = vmatprep.subr.mxu0 0.0
  %1334 = vmatpush1.msra.mxu0 %v1291
  %1335 = vmatprep.subr.mxu0 0.0
  %1336 = vmatpush1.msra.mxu0 %v1290
  %1337 = vmatprep.subr.mxu0 0.0
  %1338 = vmatpush1.msra.mxu0 %v1289
  %1339 = vmatprep.subr.mxu0 0.0
  %1340 = vmatpush1.msra.mxu0 %v1288
  %1341 = vmatprep.subr.mxu0 0.0
  %1342 = vmatpush2.msra.mxu0 0.0
  %1343 = vmatprep.subr.mxu0 0.0
  %1344 = vmatpush2.msra.mxu0 0.0
  %1345 = vmatprep.subr.mxu0 0.0
  %1346 = vmatpush2.msra.mxu0 0.0
  %1347 = vmatprep.subr.mxu0 0.0
  %1348 = vmatpush2.msra.mxu0 0.0
  %1349 = vmatprep.subr.mxu0 0.0
  %1350 = vmatpush2.msra.mxu0 0.0
  %1351 = vmatprep.subr.mxu0 0.0
  %1352 = vmatpush2.msra.mxu0 0.0
  %1353 = vmatprep.subr.mxu0 0.0
  %1354 = vmatpush2.msra.mxu0 0.0
  %1355 = vmatprep.subr.mxu0 0.0
  %1356 = vmatpush2.msra.mxu0 0.0
  %1357 = vmatprep.subr.mxu0 0.0
  %1358 = vmatpush2.msra.mxu0 0.0
  %1359 = vmatprep.subr.mxu0 0.0
  %1360 = vmatpush2.msra.mxu0 0.0
  %1361 = vmatprep.subr.mxu0 0.0
  %1362 = vmatpush2.msra.mxu0 0.0
  %1363 = vmatprep.subr.mxu0 0.0
  %1364 = vmatpush2.msra.mxu0 0.0
  %1365 = vmatprep.subr.mxu0 0.0
  %1366 = vmatpush2.msra.mxu0 0.0
  %1367 = vmatprep.subr.mxu0 0.0
  %1368 = vmatpush2.msra.mxu0 0.0
  %1369 = vmatprep.subr.mxu0 0.0
  %1370 = vmatpush2.msra.mxu0 0.0
  %1371 = vmatprep.subr.mxu0 0.0
  %1372 = vmatpush2.msra.mxu0 0.0
  %1373 = vmatprep.mubr.f32.mxu0 0.0
  %1374 = vmatmul.mubr.f32.gmra.mxu0 %v1304
  %v1375 = vpop.f32.mrf.mxu0
  %v1376 = vadd.f32 %v1301, %v1375
  %v1377 = vpop.f32.mrf.mxu0
  %1378 = vmatprep.mubr.f32.mxu0 0.0
  %1379 = vmatmul.mubr.f32.gmra.mxu0 %v1307
  %v1380 = vpop.f32.mrf.mxu0
  %v1381 = vadd.f32 %v1301, %v1380
  %v1382 = vpop.f32.mrf.mxu0
  %1383 = vdwg.mxu0
  %v1384 = vtanh.pop %v1376
  %v1385 = vtanh.pop %v1381
  %v1386 = vld [vmem:[%s6] sm:$0xff]
  %v1387 = vld [vmem:[%s6 + $0x8] sm:$0xff]
  %v1388 = vld [vmem:[%s6 + $0x10] sm:$0xff]
  %v1389 = vld [vmem:[%s6 + $0x18] sm:$0xff]
  %v1390 = vld [vmem:[%s6 + $0x20] sm:$0xff]
  %v1391 = vld [vmem:[%s6 + $0x28] sm:$0xff]
  %v1392 = vld [vmem:[%s6 + $0x30] sm:$0xff]
  %v1393 = vld [vmem:[%s6 + $0x38] sm:$0xff]
  %v1394 = vld [vmem:[%s7] sm:$0x1]
  %v1396 = vlaneseq
  %v1397 = vshrl.u32 %v1396, 7
  %v1398 = vsub.s32 0, %v1397
  %v1399 = vrot.slane %v1394, %v1398
  %v1402 = vsel %vm151, %v1384, 0
  %v1405 = vsel %vm151, %v1385, 0
  %1407 = vmatprep.subr.mxu0 0.0
  %1408 = vmatpush1.msra.mxu0 0.0
  %1409 = vmatprep.subr.mxu0 0.0
  %1410 = vmatpush1.msra.mxu0 0.0
  %1411 = vmatprep.subr.mxu0 0.0
  %1412 = vmatpush1.msra.mxu0 0.0
  %1413 = vmatprep.subr.mxu0 0.0
  %1414 = vmatpush1.msra.mxu0 0.0
  %1415 = vmatprep.subr.mxu0 0.0
  %1416 = vmatpush1.msra.mxu0 0.0
  %1417 = vmatprep.subr.mxu0 0.0
  %1418 = vmatpush1.msra.mxu0 0.0
  %1419 = vmatprep.subr.mxu0 0.0
  %1420 = vmatpush1.msra.mxu0 0.0
  %1421 = vmatprep.subr.mxu0 0.0
  %1422 = vmatpush1.msra.mxu0 0.0
  %1423 = vmatprep.subr.mxu0 0.0
  %1424 = vmatpush1.msra.mxu0 %v1393
  %1425 = vmatprep.subr.mxu0 0.0
  %1426 = vmatpush1.msra.mxu0 %v1392
  %1427 = vmatprep.subr.mxu0 0.0
  %1428 = vmatpush1.msra.mxu0 %v1391
  %1429 = vmatprep.subr.mxu0 0.0
  %1430 = vmatpush1.msra.mxu0 %v1390
  %1431 = vmatprep.subr.mxu0 0.0
  %1432 = vmatpush1.msra.mxu0 %v1389
  %1433 = vmatprep.subr.mxu0 0.0
  %1434 = vmatpush1.msra.mxu0 %v1388
  %1435 = vmatprep.subr.mxu0 0.0
  %1436 = vmatpush1.msra.mxu0 %v1387
  %1437 = vmatprep.subr.mxu0 0.0
  %1438 = vmatpush1.msra.mxu0 %v1386
  %1439 = vmatprep.subr.mxu0 0.0
  %1440 = vmatpush2.msra.mxu0 0.0
  %1441 = vmatprep.subr.mxu0 0.0
  %1442 = vmatpush2.msra.mxu0 0.0
  %1443 = vmatprep.subr.mxu0 0.0
  %1444 = vmatpush2.msra.mxu0 0.0
  %1445 = vmatprep.subr.mxu0 0.0
  %1446 = vmatpush2.msra.mxu0 0.0
  %1447 = vmatprep.subr.mxu0 0.0
  %1448 = vmatpush2.msra.mxu0 0.0
  %1449 = vmatprep.subr.mxu0 0.0
  %1450 = vmatpush2.msra.mxu0 0.0
  %1451 = vmatprep.subr.mxu0 0.0
  %1452 = vmatpush2.msra.mxu0 0.0
  %1453 = vmatprep.subr.mxu0 0.0
  %1454 = vmatpush2.msra.mxu0 0.0
  %1455 = vmatprep.subr.mxu0 0.0
  %1456 = vmatpush2.msra.mxu0 0.0
  %1457 = vmatprep.subr.mxu0 0.0
  %1458 = vmatpush2.msra.mxu0 0.0
  %1459 = vmatprep.subr.mxu0 0.0
  %1460 = vmatpush2.msra.mxu0 0.0
  %1461 = vmatprep.subr.mxu0 0.0
  %1462 = vmatpush2.msra.mxu0 0.0
  %1463 = vmatprep.subr.mxu0 0.0
  %1464 = vmatpush2.msra.mxu0 0.0
  %1465 = vmatprep.subr.mxu0 0.0
  %1466 = vmatpush2.msra.mxu0 0.0
  %1467 = vmatprep.subr.mxu0 0.0
  %1468 = vmatpush2.msra.mxu0 0.0
  %1469 = vmatprep.subr.mxu0 0.0
  %1470 = vmatpush2.msra.mxu0 0.0
  %1471 = vmatprep.mubr.f32.mxu0 0.0
  %1472 = vmatmul.mubr.f32.gmra.mxu0 %v1402
  %v1473 = vpop.f32.mrf.mxu0
  %v1474 = vadd.f32 %v1399, %v1473
  %v1475 = vpop.f32.mrf.mxu0
  %1476 = vmatprep.mubr.f32.mxu0 0.0
  %1477 = vmatmul.mubr.f32.gmra.mxu0 %v1405
  %v1478 = vpop.f32.mrf.mxu0
  %v1479 = vadd.f32 %v1399, %v1478
  %v1480 = vpop.f32.mrf.mxu0
  %1481 = vdwg.mxu0
  %1482 = vst [vmem:[%s8] sm:$0xff] %v1474
  %1483 = vst [vmem:[%s8 + $0x8] sm:$0xff] %v1479
  // Predicated region
  $region34: #{ner_lstm_forward.1} parent=0 // pred_check
    _
  $region35: #{ner_lstm_forward.1} parent=0 // pred_check_branch
    %1485 = sbr.rel (0) target = $region37
  $region36: #{ner_lstm_forward.1} parent=0 // pred_region
    _
  $region37: #{ner_lstm_forward.1} parent=0 // pred_fallthru
    _
  // Predicated region
  $region38: #{ner_lstm_forward.1} parent=0 // pred_check
    _
  $region39: #{ner_lstm_forward.1} parent=0 // pred_check_branch
    %1487 = sbr.rel (0) target = $region41
  $region40: #{ner_lstm_forward.1} parent=0 // pred_region
    _
  $region41: #{ner_lstm_forward.1} parent=0 // pred_fallthru
    _

</llo_original>
